<compile_context>
chip_gen: v7x
topology: tpu7x:2x2x1
jax: 0.10.0
libtpu: 0.0.40
codegen_flags: <defaults>
</compile_context>

<pallas_src>
import functools

import jax
import jax.numpy as jnp
from jax import lax
from jax.experimental import pallas as pl
from jax.experimental.pallas import tpu as pltpu

_BN_EPS = 1e-5
_COS_EPS = 1e-8


# ----------------------------- in-kernel math ------------------------------ #

def _mlp_head(x, w1, g1, b1, w2, last_bn):
    """Linear -> BN(train, batch stats) -> ReLU -> Linear [-> BN(affine=False)]."""
    h = jnp.dot(x, w1, preferred_element_type=jnp.float32)
    mu = jnp.mean(h, axis=0, keepdims=True)
    var = jnp.mean(jnp.square(h - mu), axis=0, keepdims=True)  # biased (torch BN train mode)
    h = (h - mu) * lax.rsqrt(var + _BN_EPS)
    h = h * g1 + b1
    h = jnp.maximum(h, 0.0)
    y = jnp.dot(h, w2, preferred_element_type=jnp.float32)
    if last_bn:
        mu2 = jnp.mean(y, axis=0, keepdims=True)
        var2 = jnp.mean(jnp.square(y - mu2), axis=0, keepdims=True)
        y = (y - mu2) * lax.rsqrt(var2 + _BN_EPS)
    return y


def _row_normalize(v):
    # rsqrt goes to the EUP slot (free next to the VALU/MXU work).
    return v * lax.rsqrt(jnp.maximum(jnp.sum(v * v, axis=1, keepdims=True), 1e-24))


def _infonce(q, k, temperature):
    qn = _row_normalize(q)
    kn = _row_normalize(k)
    # q @ k^T via a contracting dim (no explicit transpose / XLU pass).
    # TODO(synk): for batch >= 2048 tile this (N, N) logits block flash-style
    # with an online log-sum-exp instead of one whole-array block.
    logits = lax.dot_general(qn, kn, (((1,), (1,)), ((), ())),
                             preferred_element_type=jnp.float32)
    logits = logits * (1.0 / temperature)
    n = logits.shape[0]
    diag = (lax.broadcasted_iota(jnp.int32, (n, n), 0)
            == lax.broadcasted_iota(jnp.int32, (n, n), 1))
    m = jnp.max(logits, axis=1, keepdims=True)
    lse = jnp.log(jnp.sum(jnp.exp(logits - m), axis=1, keepdims=True)) + m
    pos = jnp.sum(jnp.where(diag, logits, 0.0), axis=1, keepdims=True)
    # torch CrossEntropyLoss (mean) * 2T
    return jnp.mean(lse - pos, keepdims=True) * (2.0 * temperature)  # (1, 1)


def _cosine_mean(a, b):
    num = jnp.sum(a * b, axis=1, keepdims=True)
    den = (jnp.maximum(jnp.sqrt(jnp.sum(a * a, axis=1, keepdims=True)), _COS_EPS)
           * jnp.maximum(jnp.sqrt(jnp.sum(b * b, axis=1, keepdims=True)), _COS_EPS))
    return jnp.mean(num / den, keepdims=True)  # (1, 1)


# ------------------------------ Pallas kernel ------------------------------- #

def _fused_moco_kernel(x_ref, bw_ref,
                       pj_w1_ref, pj_g1_ref, pj_b1_ref, pj_w2_ref,
                       pr_w1_ref, pr_g1_ref, pr_b1_ref, pr_w2_ref,
                       o_ref, q1_sc, k1_sc, *, temperature):
    """Grid = (2,) over views.  Each step: backbone -> projector -> predictor
    for one view (BN stats are per-view, as in the reference where each view
    passes through the heads separately).  View-0 results are carried in VMEM
    scratch; the last step computes the symmetric InfoNCE loss + logging stats
    and writes the lane-dense (1, 128) output row."""
    v = pl.program_id(0)

    # TODO(synk): at realistic MoCo sizes (flat ~1.5e5, batch >= 256) the
    # backbone matmul must be grid-tiled (tm,tk)x(tk,tn) with an f32 VMEM
    # accumulator instead of a whole-array VMEM block.
    x = x_ref[...]                                                     # (N, FLAT)
    latent = jnp.dot(x, bw_ref[...], preferred_element_type=jnp.float32)
    z = _mlp_head(latent, pj_w1_ref[...], pj_g1_ref[...], pj_b1_ref[...],
                  pj_w2_ref[...], last_bn=True)                        # student proj == teacher key
    q = _mlp_head(z, pr_w1_ref[...], pr_g1_ref[...], pr_b1_ref[...],
                  pr_w2_ref[...], last_bn=False)                       # predictor output

    @pl.when(v == 0)
    def _():
        o_ref[...] = jnp.zeros_like(o_ref)
        q1_sc[...] = q
        k1_sc[...] = z

    @pl.when(v == pl.num_programs(0) - 1)
    def _():
        q1 = q1_sc[...]
        k1 = k1_sc[...]
        q2 = q
        k2 = z
        loss = (_infonce(q1, k2, temperature) + _infonce(q2, k1, temperature)) * 0.5
        qk_sim = _cosine_mean(q1, k1)
        z_sim = _cosine_mean(q1, k2)
        lane = lax.broadcasted_iota(jnp.int32, o_ref.shape, 1)
        o_ref[...] = (jnp.where(lane == 0, loss, 0.0)
                      + jnp.where(lane == 1, qk_sim, 0.0)
                      + jnp.where(lane == 2, z_sim, 0.0))


# -------------------------------- wrapper ----------------------------------- #

def moco_fused_forward(params, x_flat, temperature):
    """x_flat: (2, N, FLAT) -> (loss, qk@sim, z@sim). Single pallas_call."""
    n_views, n, flat = x_flat.shape
    out_dim = params["projector"]["w2"].shape[1]

    weights = (params["backbone_w"],
               params["projector"]["w1"], params["projector"]["g1"],
               params["projector"]["b1"], params["projector"]["w2"],
               params["predictor"]["w1"], params["predictor"]["g1"],
               params["predictor"]["b1"], params["predictor"]["w2"])

    def resident_spec(a):
        nd = a.ndim
        # Constant block index across the grid -> weights stay VMEM-resident,
        # DMA'd exactly once.
        return pl.BlockSpec(a.shape, lambda v, _nd=nd: (0,) * _nd)

    in_specs = ([pl.BlockSpec((None, n, flat), lambda v: (v, 0, 0))]
                + [resident_spec(w) for w in weights])

    kernel = functools.partial(_fused_moco_kernel, temperature=float(temperature))
    stats = pl.pallas_call(
        kernel,
        grid=(n_views,),
        out_shape=jax.ShapeDtypeStruct((1, 128), jnp.float32),
        in_specs=in_specs,
        out_specs=pl.BlockSpec((1, 128), lambda v: (0, 0)),
        scratch_shapes=[pltpu.VMEM((n, out_dim), jnp.float32),   # q1 carry
                        pltpu.VMEM((n, out_dim), jnp.float32)],  # k1 carry
        # Carried dependency (view-0 scratch consumed at the last step) =>
        # the view axis must be "arbitrary".
        compiler_params=pltpu.CompilerParams(
            dimension_semantics=("arbitrary",)),
    )(x_flat, *weights)
    return stats[0, 0], stats[0, 1], stats[0, 2]


# ------------------------------- MoCo model ---------------------------------- #

def init_head(key, in_dim, mlp_dim, out_dim):
    k1, k2 = jax.random.split(key)
    return {
        "w1": (jax.random.normal(k1, (in_dim, mlp_dim), jnp.float32)
               / jnp.sqrt(jnp.float32(in_dim))),
        "g1": jnp.ones((1, mlp_dim), jnp.float32),
        "b1": jnp.zeros((1, mlp_dim), jnp.float32),
        "w2": (jax.random.normal(k2, (mlp_dim, out_dim), jnp.float32)
               / jnp.sqrt(jnp.float32(mlp_dim))),
    }


def init_moco(key, img_shape, embed_dim, mlp_dim, out_dim):
    # All feature dims are chosen as multiples of 128 so every VMEM tensor is
    # lane-dense; for non-multiple dims, zero-pad weights to the next multiple
    # of 128 (exact through linear / BN / ReLU / L2-normalize).
    c, h, w = img_shape
    kb, kp, kq = jax.random.split(key, 3)
    flat = c * h * w
    params = {
        # TODO(synk): create_backbone() is gin-configured upstream; a synthetic
        # flatten + bias-free Linear(C*H*W, embed_dim) backbone stands in.
        "backbone_w": (jax.random.normal(kb, (flat, embed_dim), jnp.float32)
                       / jnp.sqrt(jnp.float32(flat))),
        "projector": init_head(kp, embed_dim, mlp_dim, out_dim),
        "predictor": init_head(kq, out_dim, mlp_dim, out_dim),
    }
    # update(0): teacher <- student (exact copy), so the teacher path reuses
    # the same parameter values -- no separate teacher params are materialized.
    return params


def moco_forward(params, x1, x2, temperature=1.0):
    n = x1.shape[0]
    x = jnp.stack([x1, x2], axis=0).reshape(2, n, -1).astype(jnp.float32)
    loss, qk_sim, z_sim = moco_fused_forward(params, x, temperature)
    return loss, {"qk@sim": qk_sim, "z@sim": z_sim}


# ---------------------------------- main ------------------------------------- #

if __name__ == "__main__":
    # Small, forward-consistent, lane-aligned shapes:
    #   flat = C*H*W = 256, embed = 128, mlp = 256, out = 128 (all % 128 == 0).
    N, C, H, W = 8, 4, 8, 8
    EMBED_DIM, MLP_DIM, OUT_DIM = 128, 256, 128
    T = 1.0

    key = jax.random.PRNGKey(0)
    kx1, kx2, kparams = jax.random.split(key, 3)
    x1 = jax.random.normal(kx1, (N, C, H, W), jnp.float32)
    x2 = jax.random.normal(kx2, (N, C, H, W), jnp.float32)

    params = init_moco(kparams, (C, H, W), EMBED_DIM, MLP_DIM, OUT_DIM)

    fwd = jax.jit(functools.partial(moco_forward, temperature=T))
    loss, log = fwd(params, x1, x2)
    loss = jax.block_until_ready(loss)
    jax.block_until_ready(log["qk@sim"])
    jax.block_until_ready(log["z@sim"])

    assert jnp.isfinite(loss)
    assert jnp.isfinite(log["qk@sim"]) and jnp.isfinite(log["z@sim"])
    print("KERNEL_OK")
</pallas_src>

<mosaic_0001>
module attributes {stable_mosaic.version = 11 : i64} {
  func.func @_fused_moco_kernel(%arg0: i32, %arg1: memref<1x8x256xf32, #tpu.memory_space<vmem>>, %arg2: memref<256x128xf32, #tpu.memory_space<vmem>>, %arg3: memref<128x256xf32, #tpu.memory_space<vmem>>, %arg4: memref<1x256xf32, #tpu.memory_space<vmem>>, %arg5: memref<1x256xf32, #tpu.memory_space<vmem>>, %arg6: memref<256x128xf32, #tpu.memory_space<vmem>>, %arg7: memref<128x256xf32, #tpu.memory_space<vmem>>, %arg8: memref<1x256xf32, #tpu.memory_space<vmem>>, %arg9: memref<1x256xf32, #tpu.memory_space<vmem>>, %arg10: memref<256x128xf32, #tpu.memory_space<vmem>>, %arg11: memref<1x128xf32, #tpu.memory_space<vmem>>, %arg12: memref<8x128xf32, #tpu.memory_space<vmem>>, %arg13: memref<8x128xf32, #tpu.memory_space<vmem>>) attributes {dimension_semantics = [#tpu.dimension_semantics<arbitrary>], iteration_bounds = array<i64: 2>, scalar_prefetch = 0 : i64, scratch_operands = 2 : i64, tpu.core_type = #tpu.core_type<tc>, window_params = [{transform_indices = @transform_0, window_bounds = array<i64: 1, 8, 256>}, {pipeline_mode = #tpu.pipeline_mode<synchronous>, transform_indices = @transform_1, window_bounds = array<i64: 256, 128>}, {pipeline_mode = #tpu.pipeline_mode<synchronous>, transform_indices = @transform_2, window_bounds = array<i64: 128, 256>}, {pipeline_mode = #tpu.pipeline_mode<synchronous>, transform_indices = @transform_3, window_bounds = array<i64: 1, 256>}, {pipeline_mode = #tpu.pipeline_mode<synchronous>, transform_indices = @transform_4, window_bounds = array<i64: 1, 256>}, {pipeline_mode = #tpu.pipeline_mode<synchronous>, transform_indices = @transform_5, window_bounds = array<i64: 256, 128>}, {pipeline_mode = #tpu.pipeline_mode<synchronous>, transform_indices = @transform_6, window_bounds = array<i64: 128, 256>}, {pipeline_mode = #tpu.pipeline_mode<synchronous>, transform_indices = @transform_7, window_bounds = array<i64: 1, 256>}, {pipeline_mode = #tpu.pipeline_mode<synchronous>, transform_indices = @transform_8, window_bounds = array<i64: 1, 256>}, {pipeline_mode = #tpu.pipeline_mode<synchronous>, transform_indices = @transform_9, window_bounds = array<i64: 256, 128>}, {pipeline_mode = #tpu.pipeline_mode<synchronous>, transform_indices = @transform_10, window_bounds = array<i64: 1, 128>}]} {
    %c0 = arith.constant 0 : index
    %c0_0 = arith.constant 0 : index
    %c0_1 = arith.constant 0 : index
    %0 = vector.load %arg1[%c0, %c0_0, %c0_1] : memref<1x8x256xf32, #tpu.memory_space<vmem>>, vector<1x8x256xf32>
    %1 = vector.shape_cast %0 : vector<1x8x256xf32> to vector<8x256xf32>
    %c0_2 = arith.constant 0 : index
    %c0_3 = arith.constant 0 : index
    %2 = vector.load %arg2[%c0_2, %c0_3] : memref<256x128xf32, #tpu.memory_space<vmem>>, vector<256x128xf32>
    %cst = arith.constant dense<0.000000e+00> : vector<8x128xf32>
    %3 = tpu.matmul %1, %2, %cst {dimension_numbers = #tpu.dot_dimension_numbers<[1], [0], [0], [1], [0, 0, 1, 1], [], []>} : vector<8x256xf32>, vector<256x128xf32>, vector<8x128xf32> -> vector<8x128xf32>
    %c0_4 = arith.constant 0 : index
    %c0_5 = arith.constant 0 : index
    %4 = vector.load %arg3[%c0_4, %c0_5] : memref<128x256xf32, #tpu.memory_space<vmem>>, vector<128x256xf32>
    %c0_6 = arith.constant 0 : index
    %c0_7 = arith.constant 0 : index
    %5 = vector.load %arg4[%c0_6, %c0_7] : memref<1x256xf32, #tpu.memory_space<vmem>>, vector<1x256xf32>
    %c0_8 = arith.constant 0 : index
    %c0_9 = arith.constant 0 : index
    %6 = vector.load %arg5[%c0_8, %c0_9] : memref<1x256xf32, #tpu.memory_space<vmem>>, vector<1x256xf32>
    %c0_10 = arith.constant 0 : index
    %c0_11 = arith.constant 0 : index
    %7 = vector.load %arg6[%c0_10, %c0_11] : memref<256x128xf32, #tpu.memory_space<vmem>>, vector<256x128xf32>
    %cst_12 = arith.constant dense<0.000000e+00> : vector<8x256xf32>
    %8 = tpu.matmul %3, %4, %cst_12 {dimension_numbers = #tpu.dot_dimension_numbers<[1], [0], [0], [1], [0, 0, 1, 1], [], []>} : vector<8x128xf32>, vector<128x256xf32>, vector<8x256xf32> -> vector<8x256xf32>
    %cst_13 = arith.constant dense<0.000000e+00> : vector<256xf32>
    %9 = vector.multi_reduction <add>, %8, %cst_13 [0] : vector<8x256xf32> to vector<256xf32>
    %10 = vector.shape_cast %9 : vector<256xf32> to vector<1x256xf32>
    %cst_14 = arith.constant 8.000000e+00 : f32
    %11 = vector.broadcast %cst_14 : f32 to vector<1x256xf32>
    %12 = arith.divf %10, %11 : vector<1x256xf32>
    %13 = vector.broadcast %12 : vector<1x256xf32> to vector<8x256xf32>
    %14 = arith.subf %8, %13 : vector<8x256xf32>
    %15 = arith.mulf %14, %14 : vector<8x256xf32>
    %cst_15 = arith.constant dense<0.000000e+00> : vector<256xf32>
    %16 = vector.multi_reduction <add>, %15, %cst_15 [0] : vector<8x256xf32> to vector<256xf32>
    %17 = vector.shape_cast %16 : vector<256xf32> to vector<1x256xf32>
    %cst_16 = arith.constant 8.000000e+00 : f32
    %18 = vector.broadcast %cst_16 : f32 to vector<1x256xf32>
    %19 = arith.divf %17, %18 : vector<1x256xf32>
    %20 = vector.broadcast %12 : vector<1x256xf32> to vector<8x256xf32>
    %21 = arith.subf %8, %20 : vector<8x256xf32>
    %cst_17 = arith.constant 9.99999974E-6 : f32
    %22 = vector.broadcast %cst_17 : f32 to vector<1x256xf32>
    %23 = arith.addf %19, %22 : vector<1x256xf32>
    %24 = math.rsqrt %23 : vector<1x256xf32>
    %25 = vector.broadcast %24 : vector<1x256xf32> to vector<8x256xf32>
    %26 = arith.mulf %21, %25 : vector<8x256xf32>
    %27 = vector.broadcast %5 : vector<1x256xf32> to vector<8x256xf32>
    %28 = arith.mulf %26, %27 : vector<8x256xf32>
    %29 = vector.broadcast %6 : vector<1x256xf32> to vector<8x256xf32>
    %30 = arith.addf %28, %29 : vector<8x256xf32>
    %cst_18 = arith.constant 0.000000e+00 : f32
    %31 = vector.broadcast %cst_18 : f32 to vector<8x256xf32>
    %32 = arith.maximumf %30, %31 : vector<8x256xf32>
    %cst_19 = arith.constant dense<0.000000e+00> : vector<8x128xf32>
    %33 = tpu.matmul %32, %7, %cst_19 {dimension_numbers = #tpu.dot_dimension_numbers<[1], [0], [0], [1], [0, 0, 1, 1], [], []>} : vector<8x256xf32>, vector<256x128xf32>, vector<8x128xf32> -> vector<8x128xf32>
    %cst_20 = arith.constant dense<0.000000e+00> : vector<128xf32>
    %34 = vector.multi_reduction <add>, %33, %cst_20 [0] : vector<8x128xf32> to vector<128xf32>
    %35 = vector.shape_cast %34 : vector<128xf32> to vector<1x128xf32>
    %cst_21 = arith.constant 8.000000e+00 : f32
    %36 = vector.broadcast %cst_21 : f32 to vector<1x128xf32>
    %37 = arith.divf %35, %36 : vector<1x128xf32>
    %38 = vector.broadcast %37 : vector<1x128xf32> to vector<8x128xf32>
    %39 = arith.subf %33, %38 : vector<8x128xf32>
    %40 = arith.mulf %39, %39 : vector<8x128xf32>
    %cst_22 = arith.constant dense<0.000000e+00> : vector<128xf32>
    %41 = vector.multi_reduction <add>, %40, %cst_22 [0] : vector<8x128xf32> to vector<128xf32>
    %42 = vector.shape_cast %41 : vector<128xf32> to vector<1x128xf32>
    %cst_23 = arith.constant 8.000000e+00 : f32
    %43 = vector.broadcast %cst_23 : f32 to vector<1x128xf32>
    %44 = arith.divf %42, %43 : vector<1x128xf32>
    %45 = vector.broadcast %37 : vector<1x128xf32> to vector<8x128xf32>
    %46 = arith.subf %33, %45 : vector<8x128xf32>
    %cst_24 = arith.constant 9.99999974E-6 : f32
    %47 = vector.broadcast %cst_24 : f32 to vector<1x128xf32>
    %48 = arith.addf %44, %47 : vector<1x128xf32>
    %49 = math.rsqrt %48 : vector<1x128xf32>
    %50 = vector.broadcast %49 : vector<1x128xf32> to vector<8x128xf32>
    %51 = arith.mulf %46, %50 : vector<8x128xf32>
    %c0_25 = arith.constant 0 : index
    %c0_26 = arith.constant 0 : index
    %52 = vector.load %arg7[%c0_25, %c0_26] : memref<128x256xf32, #tpu.memory_space<vmem>>, vector<128x256xf32>
    %c0_27 = arith.constant 0 : index
    %c0_28 = arith.constant 0 : index
    %53 = vector.load %arg8[%c0_27, %c0_28] : memref<1x256xf32, #tpu.memory_space<vmem>>, vector<1x256xf32>
    %c0_29 = arith.constant 0 : index
    %c0_30 = arith.constant 0 : index
    %54 = vector.load %arg9[%c0_29, %c0_30] : memref<1x256xf32, #tpu.memory_space<vmem>>, vector<1x256xf32>
    %c0_31 = arith.constant 0 : index
    %c0_32 = arith.constant 0 : index
    %55 = vector.load %arg10[%c0_31, %c0_32] : memref<256x128xf32, #tpu.memory_space<vmem>>, vector<256x128xf32>
    %cst_33 = arith.constant dense<0.000000e+00> : vector<8x256xf32>
    %56 = tpu.matmul %51, %52, %cst_33 {dimension_numbers = #tpu.dot_dimension_numbers<[1], [0], [0], [1], [0, 0, 1, 1], [], []>} : vector<8x128xf32>, vector<128x256xf32>, vector<8x256xf32> -> vector<8x256xf32>
    %cst_34 = arith.constant dense<0.000000e+00> : vector<256xf32>
    %57 = vector.multi_reduction <add>, %56, %cst_34 [0] : vector<8x256xf32> to vector<256xf32>
    %58 = vector.shape_cast %57 : vector<256xf32> to vector<1x256xf32>
    %cst_35 = arith.constant 8.000000e+00 : f32
    %59 = vector.broadcast %cst_35 : f32 to vector<1x256xf32>
    %60 = arith.divf %58, %59 : vector<1x256xf32>
    %61 = vector.broadcast %60 : vector<1x256xf32> to vector<8x256xf32>
    %62 = arith.subf %56, %61 : vector<8x256xf32>
    %63 = arith.mulf %62, %62 : vector<8x256xf32>
    %cst_36 = arith.constant dense<0.000000e+00> : vector<256xf32>
    %64 = vector.multi_reduction <add>, %63, %cst_36 [0] : vector<8x256xf32> to vector<256xf32>
    %65 = vector.shape_cast %64 : vector<256xf32> to vector<1x256xf32>
    %cst_37 = arith.constant 8.000000e+00 : f32
    %66 = vector.broadcast %cst_37 : f32 to vector<1x256xf32>
    %67 = arith.divf %65, %66 : vector<1x256xf32>
    %68 = vector.broadcast %60 : vector<1x256xf32> to vector<8x256xf32>
    %69 = arith.subf %56, %68 : vector<8x256xf32>
    %cst_38 = arith.constant 9.99999974E-6 : f32
    %70 = vector.broadcast %cst_38 : f32 to vector<1x256xf32>
    %71 = arith.addf %67, %70 : vector<1x256xf32>
    %72 = math.rsqrt %71 : vector<1x256xf32>
    %73 = vector.broadcast %72 : vector<1x256xf32> to vector<8x256xf32>
    %74 = arith.mulf %69, %73 : vector<8x256xf32>
    %75 = vector.broadcast %53 : vector<1x256xf32> to vector<8x256xf32>
    %76 = arith.mulf %74, %75 : vector<8x256xf32>
    %77 = vector.broadcast %54 : vector<1x256xf32> to vector<8x256xf32>
    %78 = arith.addf %76, %77 : vector<8x256xf32>
    %cst_39 = arith.constant 0.000000e+00 : f32
    %79 = vector.broadcast %cst_39 : f32 to vector<8x256xf32>
    %80 = arith.maximumf %78, %79 : vector<8x256xf32>
    %cst_40 = arith.constant dense<0.000000e+00> : vector<8x128xf32>
    %81 = tpu.matmul %80, %55, %cst_40 {dimension_numbers = #tpu.dot_dimension_numbers<[1], [0], [0], [1], [0, 0, 1, 1], [], []>} : vector<8x256xf32>, vector<256x128xf32>, vector<8x128xf32> -> vector<8x128xf32>
    %c0_i32 = arith.constant 0 : i32
    %82 = arith.cmpi eq, %arg0, %c0_i32 : i32
    %83 = arith.extui %82 : i1 to i32
    %c0_i32_41 = arith.constant 0 : i32
    %84 = arith.cmpi ne, %83, %c0_i32_41 : i32
    scf.if %84 {
      %cst_43 = arith.constant 0.000000e+00 : f32
      %88 = vector.broadcast %cst_43 : f32 to vector<1x128xf32>
      %c0_44 = arith.constant 0 : index
      %c0_45 = arith.constant 0 : index
      %89 = vector.load %arg11[%c0_44, %c0_45] : memref<1x128xf32, #tpu.memory_space<vmem>>, vector<1x128xf32>
      tpu.vector_store %arg11[%c0_44, %c0_45], %88 {strides = array<i32>} : memref<1x128xf32, #tpu.memory_space<vmem>>, vector<1x128xf32>,
      %c0_46 = arith.constant 0 : index
      %c0_47 = arith.constant 0 : index
      %90 = vector.load %arg12[%c0_46, %c0_47] : memref<8x128xf32, #tpu.memory_space<vmem>>, vector<8x128xf32>
      tpu.vector_store %arg12[%c0_46, %c0_47], %81 {strides = array<i32>} : memref<8x128xf32, #tpu.memory_space<vmem>>, vector<8x128xf32>,
      %c0_48 = arith.constant 0 : index
      %c0_49 = arith.constant 0 : index
      %91 = vector.load %arg13[%c0_48, %c0_49] : memref<8x128xf32, #tpu.memory_space<vmem>>, vector<8x128xf32>
      tpu.vector_store %arg13[%c0_48, %c0_49], %51 {strides = array<i32>} : memref<8x128xf32, #tpu.memory_space<vmem>>, vector<8x128xf32>,
    } else {
    }
    %c1_i32 = arith.constant 1 : i32
    %85 = arith.cmpi eq, %arg0, %c1_i32 : i32
    %86 = arith.extui %85 : i1 to i32
    %c0_i32_42 = arith.constant 0 : i32
    %87 = arith.cmpi ne, %86, %c0_i32_42 : i32
    scf.if %87 {
      %c0_43 = arith.constant 0 : index
      %c0_44 = arith.constant 0 : index
      %88 = vector.load %arg12[%c0_43, %c0_44] : memref<8x128xf32, #tpu.memory_space<vmem>>, vector<8x128xf32>
      %c0_45 = arith.constant 0 : index
      %c0_46 = arith.constant 0 : index
      %89 = vector.load %arg13[%c0_45, %c0_46] : memref<8x128xf32, #tpu.memory_space<vmem>>, vector<8x128xf32>
      %90 = arith.mulf %88, %88 : vector<8x128xf32>
      %cst_47 = arith.constant dense<0.000000e+00> : vector<8xf32>
      %91 = vector.multi_reduction <add>, %90, %cst_47 [1] : vector<8x128xf32> to vector<8xf32>
      %92 = vector.shape_cast %91 : vector<8xf32> to vector<8x1xf32>
      %cst_48 = arith.constant 1.000000e-24 : f32
      %93 = vector.broadcast %cst_48 : f32 to vector<8x1xf32>
      %94 = arith.maximumf %92, %93 : vector<8x1xf32>
      %95 = math.rsqrt %94 : vector<8x1xf32>
      %96 = vector.broadcast %95 : vector<8x1xf32> to vector<8x128xf32>
      %97 = arith.mulf %88, %96 : vector<8x128xf32>
      %98 = arith.mulf %51, %51 : vector<8x128xf32>
      %cst_49 = arith.constant dense<0.000000e+00> : vector<8xf32>
      %99 = vector.multi_reduction <add>, %98, %cst_49 [1] : vector<8x128xf32> to vector<8xf32>
      %100 = vector.shape_cast %99 : vector<8xf32> to vector<8x1xf32>
      %cst_50 = arith.constant 1.000000e-24 : f32
      %101 = vector.broadcast %cst_50 : f32 to vector<8x1xf32>
      %102 = arith.maximumf %100, %101 : vector<8x1xf32>
      %103 = math.rsqrt %102 : vector<8x1xf32>
      %104 = vector.broadcast %103 : vector<8x1xf32> to vector<8x128xf32>
      %105 = arith.mulf %51, %104 : vector<8x128xf32>
      %cst_51 = arith.constant dense<0.000000e+00> : vector<8x8xf32>
      %106 = tpu.matmul %97, %105, %cst_51 {dimension_numbers = #tpu.dot_dimension_numbers<[1], [1], [0], [0], [0, 0, 1, 0], [], []>} : vector<8x128xf32>, vector<8x128xf32>, vector<8x8xf32> -> vector<8x8xf32>
      %cst_52 = arith.constant 1.000000e+00 : f32
      %107 = vector.broadcast %cst_52 : f32 to vector<8x8xf32>
      %108 = arith.mulf %106, %107 : vector<8x8xf32>
      %109 = tpu.iota {dimensions = array<i32: 0>} : vector<8x8xi32>
      %110 = tpu.iota {dimensions = array<i32: 1>} : vector<8x8xi32>
      %111 = arith.cmpi eq, %109, %110 : vector<8x8xi32>
      %cst_53 = arith.constant dense<0xFF800000> : vector<8xf32>
      %112 = vector.multi_reduction <maximumf>, %108, %cst_53 [1] : vector<8x8xf32> to vector<8xf32>
      %113 = vector.shape_cast %112 : vector<8xf32> to vector<8x1xf32>
      %114 = vector.broadcast %113 : vector<8x1xf32> to vector<8x8xf32>
      %115 = arith.subf %108, %114 : vector<8x8xf32>
      %116 = math.exp %115 : vector<8x8xf32>
      %cst_54 = arith.constant dense<0.000000e+00> : vector<8xf32>
      %117 = vector.multi_reduction <add>, %116, %cst_54 [1] : vector<8x8xf32> to vector<8xf32>
      %118 = vector.shape_cast %117 : vector<8xf32> to vector<8x1xf32>
      %119 = math.log %118 : vector<8x1xf32>
      %120 = arith.addf %119, %113 : vector<8x1xf32>
      %cst_55 = arith.constant 0.000000e+00 : f32
      %121 = vector.broadcast %cst_55 : f32 to vector<8x8xf32>
      %122 = arith.select %111, %108, %121 : vector<8x8xi1>, vector<8x8xf32>
      %cst_56 = arith.constant dense<0.000000e+00> : vector<8xf32>
      %123 = vector.multi_reduction <add>, %122, %cst_56 [1] : vector<8x8xf32> to vector<8xf32>
      %124 = vector.shape_cast %123 : vector<8xf32> to vector<8x1xf32>
      %125 = arith.subf %120, %124 : vector<8x1xf32>
      %126 = vector.shape_cast %125 : vector<8x1xf32> to vector<1x8x1xf32>
      %cst_57 = arith.constant dense<0.000000e+00> : vector<1xf32>
      %127 = vector.multi_reduction <add>, %126, %cst_57 [1, 2] : vector<1x8x1xf32> to vector<1xf32>
      %128 = vector.shape_cast %127 : vector<1xf32> to vector<1x1x1xf32>
      %129 = vector.extract %128[0, 0, 0] : f32 from vector<1x1x1xf32>
      %130 = vector.broadcast %129 : f32 to vector<1x1xf32>
      %cst_58 = arith.constant 8.000000e+00 : f32
      %131 = vector.broadcast %cst_58 : f32 to vector<1x1xf32>
      %132 = arith.divf %130, %131 : vector<1x1xf32>
      %cst_59 = arith.constant 2.000000e+00 : f32
      %133 = vector.broadcast %cst_59 : f32 to vector<1x1xf32>
      %134 = arith.mulf %132, %133 : vector<1x1xf32>
      %135 = arith.mulf %81, %81 : vector<8x128xf32>
      %cst_60 = arith.constant dense<0.000000e+00> : vector<8xf32>
      %136 = vector.multi_reduction <add>, %135, %cst_60 [1] : vector<8x128xf32> to vector<8xf32>
      %137 = vector.shape_cast %136 : vector<8xf32> to vector<8x1xf32>
      %cst_61 = arith.constant 1.000000e-24 : f32
      %138 = vector.broadcast %cst_61 : f32 to vector<8x1xf32>
      %139 = arith.maximumf %137, %138 : vector<8x1xf32>
      %140 = math.rsqrt %139 : vector<8x1xf32>
      %141 = vector.broadcast %140 : vector<8x1xf32> to vector<8x128xf32>
      %142 = arith.mulf %81, %141 : vector<8x128xf32>
      %143 = arith.mulf %89, %89 : vector<8x128xf32>
      %cst_62 = arith.constant dense<0.000000e+00> : vector<8xf32>
      %144 = vector.multi_reduction <add>, %143, %cst_62 [1] : vector<8x128xf32> to vector<8xf32>
      %145 = vector.shape_cast %144 : vector<8xf32> to vector<8x1xf32>
      %cst_63 = arith.constant 1.000000e-24 : f32
      %146 = vector.broadcast %cst_63 : f32 to vector<8x1xf32>
      %147 = arith.maximumf %145, %146 : vector<8x1xf32>
      %148 = math.rsqrt %147 : vector<8x1xf32>
      %149 = vector.broadcast %148 : vector<8x1xf32> to vector<8x128xf32>
      %150 = arith.mulf %89, %149 : vector<8x128xf32>
      %cst_64 = arith.constant dense<0.000000e+00> : vector<8x8xf32>
      %151 = tpu.matmul %142, %150, %cst_64 {dimension_numbers = #tpu.dot_dimension_numbers<[1], [1], [0], [0], [0, 0, 1, 0], [], []>} : vector<8x128xf32>, vector<8x128xf32>, vector<8x8xf32> -> vector<8x8xf32>
      %cst_65 = arith.constant 1.000000e+00 : f32
      %152 = vector.broadcast %cst_65 : f32 to vector<8x8xf32>
      %153 = arith.mulf %151, %152 : vector<8x8xf32>
      %154 = tpu.iota {dimensions = array<i32: 0>} : vector<8x8xi32>
      %155 = tpu.iota {dimensions = array<i32: 1>} : vector<8x8xi32>
      %156 = arith.cmpi eq, %154, %155 : vector<8x8xi32>
      %cst_66 = arith.constant dense<0xFF800000> : vector<8xf32>
      %157 = vector.multi_reduction <maximumf>, %153, %cst_66 [1] : vector<8x8xf32> to vector<8xf32>
      %158 = vector.shape_cast %157 : vector<8xf32> to vector<8x1xf32>
      %159 = vector.broadcast %158 : vector<8x1xf32> to vector<8x8xf32>
      %160 = arith.subf %153, %159 : vector<8x8xf32>
      %161 = math.exp %160 : vector<8x8xf32>
      %cst_67 = arith.constant dense<0.000000e+00> : vector<8xf32>
      %162 = vector.multi_reduction <add>, %161, %cst_67 [1] : vector<8x8xf32> to vector<8xf32>
      %163 = vector.shape_cast %162 : vector<8xf32> to vector<8x1xf32>
      %164 = math.log %163 : vector<8x1xf32>
      %165 = arith.addf %164, %158 : vector<8x1xf32>
      %cst_68 = arith.constant 0.000000e+00 : f32
      %166 = vector.broadcast %cst_68 : f32 to vector<8x8xf32>
      %167 = arith.select %156, %153, %166 : vector<8x8xi1>, vector<8x8xf32>
      %cst_69 = arith.constant dense<0.000000e+00> : vector<8xf32>
      %168 = vector.multi_reduction <add>, %167, %cst_69 [1] : vector<8x8xf32> to vector<8xf32>
      %169 = vector.shape_cast %168 : vector<8xf32> to vector<8x1xf32>
      %170 = arith.subf %165, %169 : vector<8x1xf32>
      %171 = vector.shape_cast %170 : vector<8x1xf32> to vector<1x8x1xf32>
      %cst_70 = arith.constant dense<0.000000e+00> : vector<1xf32>
      %172 = vector.multi_reduction <add>, %171, %cst_70 [1, 2] : vector<1x8x1xf32> to vector<1xf32>
      %173 = vector.shape_cast %172 : vector<1xf32> to vector<1x1x1xf32>
      %174 = vector.extract %173[0, 0, 0] : f32 from vector<1x1x1xf32>
      %175 = vector.broadcast %174 : f32 to vector<1x1xf32>
      %cst_71 = arith.constant 8.000000e+00 : f32
      %176 = vector.broadcast %cst_71 : f32 to vector<1x1xf32>
      %177 = arith.divf %175, %176 : vector<1x1xf32>
      %cst_72 = arith.constant 2.000000e+00 : f32
      %178 = vector.broadcast %cst_72 : f32 to vector<1x1xf32>
      %179 = arith.mulf %177, %178 : vector<1x1xf32>
      %180 = arith.addf %134, %179 : vector<1x1xf32>
      %cst_73 = arith.constant 5.000000e-01 : f32
      %181 = vector.broadcast %cst_73 : f32 to vector<1x1xf32>
      %182 = arith.mulf %180, %181 : vector<1x1xf32>
      %183 = arith.mulf %88, %89 : vector<8x128xf32>
      %cst_74 = arith.constant dense<0.000000e+00> : vector<8xf32>
      %184 = vector.multi_reduction <add>, %183, %cst_74 [1] : vector<8x128xf32> to vector<8xf32>
      %185 = vector.shape_cast %184 : vector<8xf32> to vector<8x1xf32>
      %186 = arith.mulf %88, %88 : vector<8x128xf32>
      %cst_75 = arith.constant dense<0.000000e+00> : vector<8xf32>
      %187 = vector.multi_reduction <add>, %186, %cst_75 [1] : vector<8x128xf32> to vector<8xf32>
      %188 = vector.shape_cast %187 : vector<8xf32> to vector<8x1xf32>
      %189 = math.sqrt %188 : vector<8x1xf32>
      %cst_76 = arith.constant 9.99999993E-9 : f32
      %190 = vector.broadcast %cst_76 : f32 to vector<8x1xf32>
      %191 = arith.maximumf %189, %190 : vector<8x1xf32>
      %192 = arith.mulf %89, %89 : vector<8x128xf32>
      %cst_77 = arith.constant dense<0.000000e+00> : vector<8xf32>
      %193 = vector.multi_reduction <add>, %192, %cst_77 [1] : vector<8x128xf32> to vector<8xf32>
      %194 = vector.shape_cast %193 : vector<8xf32> to vector<8x1xf32>
      %195 = math.sqrt %194 : vector<8x1xf32>
      %cst_78 = arith.constant 9.99999993E-9 : f32
      %196 = vector.broadcast %cst_78 : f32 to vector<8x1xf32>
      %197 = arith.maximumf %195, %196 : vector<8x1xf32>
      %198 = arith.mulf %191, %197 : vector<8x1xf32>
      %199 = arith.divf %185, %198 : vector<8x1xf32>
      %200 = vector.shape_cast %199 : vector<8x1xf32> to vector<1x8x1xf32>
      %cst_79 = arith.constant dense<0.000000e+00> : vector<1xf32>
      %201 = vector.multi_reduction <add>, %200, %cst_79 [1, 2] : vector<1x8x1xf32> to vector<1xf32>
      %202 = vector.shape_cast %201 : vector<1xf32> to vector<1x1x1xf32>
      %203 = vector.extract %202[0, 0, 0] : f32 from vector<1x1x1xf32>
      %204 = vector.broadcast %203 : f32 to vector<1x1xf32>
      %cst_80 = arith.constant 8.000000e+00 : f32
      %205 = vector.broadcast %cst_80 : f32 to vector<1x1xf32>
      %206 = arith.divf %204, %205 : vector<1x1xf32>
      %207 = arith.mulf %88, %51 : vector<8x128xf32>
      %cst_81 = arith.constant dense<0.000000e+00> : vector<8xf32>
      %208 = vector.multi_reduction <add>, %207, %cst_81 [1] : vector<8x128xf32> to vector<8xf32>
      %209 = vector.shape_cast %208 : vector<8xf32> to vector<8x1xf32>
      %210 = arith.mulf %88, %88 : vector<8x128xf32>
      %cst_82 = arith.constant dense<0.000000e+00> : vector<8xf32>
      %211 = vector.multi_reduction <add>, %210, %cst_82 [1] : vector<8x128xf32> to vector<8xf32>
      %212 = vector.shape_cast %211 : vector<8xf32> to vector<8x1xf32>
      %213 = math.sqrt %212 : vector<8x1xf32>
      %cst_83 = arith.constant 9.99999993E-9 : f32
      %214 = vector.broadcast %cst_83 : f32 to vector<8x1xf32>
      %215 = arith.maximumf %213, %214 : vector<8x1xf32>
      %216 = arith.mulf %51, %51 : vector<8x128xf32>
      %cst_84 = arith.constant dense<0.000000e+00> : vector<8xf32>
      %217 = vector.multi_reduction <add>, %216, %cst_84 [1] : vector<8x128xf32> to vector<8xf32>
      %218 = vector.shape_cast %217 : vector<8xf32> to vector<8x1xf32>
      %219 = math.sqrt %218 : vector<8x1xf32>
      %cst_85 = arith.constant 9.99999993E-9 : f32
      %220 = vector.broadcast %cst_85 : f32 to vector<8x1xf32>
      %221 = arith.maximumf %219, %220 : vector<8x1xf32>
      %222 = arith.mulf %215, %221 : vector<8x1xf32>
      %223 = arith.divf %209, %222 : vector<8x1xf32>
      %224 = vector.shape_cast %223 : vector<8x1xf32> to vector<1x8x1xf32>
      %cst_86 = arith.constant dense<0.000000e+00> : vector<1xf32>
      %225 = vector.multi_reduction <add>, %224, %cst_86 [1, 2] : vector<1x8x1xf32> to vector<1xf32>
      %226 = vector.shape_cast %225 : vector<1xf32> to vector<1x1x1xf32>
      %227 = vector.extract %226[0, 0, 0] : f32 from vector<1x1x1xf32>
      %228 = vector.broadcast %227 : f32 to vector<1x1xf32>
      %cst_87 = arith.constant 8.000000e+00 : f32
      %229 = vector.broadcast %cst_87 : f32 to vector<1x1xf32>
      %230 = arith.divf %228, %229 : vector<1x1xf32>
      %231 = tpu.iota {dimensions = array<i32: 1>} : vector<1x128xi32>
      %c0_i32_88 = arith.constant 0 : i32
      %232 = vector.broadcast %c0_i32_88 : i32 to vector<1x128xi32>
      %233 = arith.cmpi eq, %231, %232 : vector<1x128xi32>
      %cst_89 = arith.constant 0.000000e+00 : f32
      %234 = vector.shape_cast %182 : vector<1x1xf32> to vector<1x1xf32>
      %235 = vector.broadcast %234 : vector<1x1xf32> to vector<1x128xf32>
      %236 = vector.broadcast %cst_89 : f32 to vector<1x128xf32>
      %237 = arith.select %233, %235, %236 : vector<1x128xi1>, vector<1x128xf32>
      %c1_i32_90 = arith.constant 1 : i32
      %238 = vector.broadcast %c1_i32_90 : i32 to vector<1x128xi32>
      %239 = arith.cmpi eq, %231, %238 : vector<1x128xi32>
      %cst_91 = arith.constant 0.000000e+00 : f32
      %240 = vector.shape_cast %206 : vector<1x1xf32> to vector<1x1xf32>
      %241 = vector.broadcast %240 : vector<1x1xf32> to vector<1x128xf32>
      %242 = vector.broadcast %cst_91 : f32 to vector<1x128xf32>
      %243 = arith.select %239, %241, %242 : vector<1x128xi1>, vector<1x128xf32>
      %244 = arith.addf %237, %243 : vector<1x128xf32>
      %c2_i32 = arith.constant 2 : i32
      %245 = vector.broadcast %c2_i32 : i32 to vector<1x128xi32>
      %246 = arith.cmpi eq, %231, %245 : vector<1x128xi32>
      %cst_92 = arith.constant 0.000000e+00 : f32
      %247 = vector.shape_cast %230 : vector<1x1xf32> to vector<1x1xf32>
      %248 = vector.broadcast %247 : vector<1x1xf32> to vector<1x128xf32>
      %249 = vector.broadcast %cst_92 : f32 to vector<1x128xf32>
      %250 = arith.select %246, %248, %249 : vector<1x128xi1>, vector<1x128xf32>
      %251 = arith.addf %244, %250 : vector<1x128xf32>
      %c0_93 = arith.constant 0 : index
      %c0_94 = arith.constant 0 : index
      %252 = vector.load %arg11[%c0_93, %c0_94] : memref<1x128xf32, #tpu.memory_space<vmem>>, vector<1x128xf32>
      tpu.vector_store %arg11[%c0_93, %c0_94], %251 {strides = array<i32>} : memref<1x128xf32, #tpu.memory_space<vmem>>, vector<1x128xf32>,
    } else {
    }
    return
  }
  func.func @transform_0(%arg0: i32) -> (i32, i32, i32) {
    %c0_i32 = arith.constant 0 : i32
    %c0_i32_0 = arith.constant 0 : i32
    %c0_i32_1 = arith.constant 0 : i32
    return %arg0, %c0_i32, %c0_i32_0 : i32, i32, i32
  }
  func.func @transform_1(%arg0: i32) -> (i32, i32) {
    %c0_i32 = arith.constant 0 : i32
    %c0_i32_0 = arith.constant 0 : i32
    %c0_i32_1 = arith.constant 0 : i32
    return %c0_i32, %c0_i32_0 : i32, i32
  }
  func.func @transform_2(%arg0: i32) -> (i32, i32) {
    %c0_i32 = arith.constant 0 : i32
    %c0_i32_0 = arith.constant 0 : i32
    %c0_i32_1 = arith.constant 0 : i32
    return %c0_i32, %c0_i32_0 : i32, i32
  }
  func.func @transform_3(%arg0: i32) -> (i32, i32) {
    %c0_i32 = arith.constant 0 : i32
    %c0_i32_0 = arith.constant 0 : i32
    %c0_i32_1 = arith.constant 0 : i32
    return %c0_i32, %c0_i32_0 : i32, i32
  }
  func.func @transform_4(%arg0: i32) -> (i32, i32) {
    %c0_i32 = arith.constant 0 : i32
    %c0_i32_0 = arith.constant 0 : i32
    %c0_i32_1 = arith.constant 0 : i32
    return %c0_i32, %c0_i32_0 : i32, i32
  }
  func.func @transform_5(%arg0: i32) -> (i32, i32) {
    %c0_i32 = arith.constant 0 : i32
    %c0_i32_0 = arith.constant 0 : i32
    %c0_i32_1 = arith.constant 0 : i32
    return %c0_i32, %c0_i32_0 : i32, i32
  }
  func.func @transform_6(%arg0: i32) -> (i32, i32) {
    %c0_i32 = arith.constant 0 : i32
    %c0_i32_0 = arith.constant 0 : i32
    %c0_i32_1 = arith.constant 0 : i32
    return %c0_i32, %c0_i32_0 : i32, i32
  }
  func.func @transform_7(%arg0: i32) -> (i32, i32) {
    %c0_i32 = arith.constant 0 : i32
    %c0_i32_0 = arith.constant 0 : i32
    %c0_i32_1 = arith.constant 0 : i32
    return %c0_i32, %c0_i32_0 : i32, i32
  }
  func.func @transform_8(%arg0: i32) -> (i32, i32) {
    %c0_i32 = arith.constant 0 : i32
    %c0_i32_0 = arith.constant 0 : i32
    %c0_i32_1 = arith.constant 0 : i32
    return %c0_i32, %c0_i32_0 : i32, i32
  }
  func.func @transform_9(%arg0: i32) -> (i32, i32) {
    %c0_i32 = arith.constant 0 : i32
    %c0_i32_0 = arith.constant 0 : i32
    %c0_i32_1 = arith.constant 0 : i32
    return %c0_i32, %c0_i32_0 : i32, i32
  }
  func.func @transform_10(%arg0: i32) -> (i32, i32) {
    %c0_i32 = arith.constant 0 : i32
    %c0_i32_0 = arith.constant 0 : i32
    %c0_i32_1 = arith.constant 0 : i32
    return %c0_i32, %c0_i32_0 : i32, i32
  }
}

</mosaic_0001>

<llo_original>
// kernel: moco_forward.1
$region0: #{moco_forward.1}
  #allocation0 [shape = 'u32[]', space=smem, size = 0x4, offset = 0x4, fixed_abs, tag = 'smem constant byte address 0x4 - core index']
  #allocation1 [shape = 'u32[144,128]{1,0:T(1,128)}', space=vmem, size = 0x12000, scoped, tag = 'internal scratch']
  #allocation2 [shape = 'f32[8,128]{1,0:T(8,128)}', space=vmem, size = 0x1000, scoped, tag = 'scratch operand']
  #allocation3 [shape = 'f32[8,128]{1,0:T(8,128)}', space=vmem, size = 0x1000, scoped, tag = 'scratch operand']
  %s0 = inlined_call_operand.vmem [shape: f32[2,8,256], index: 0, kind: input, shape index: {}]
  %s1 = inlined_call_operand.vmem [shape: f32[256,128], index: 1, kind: input, shape index: {}]
  %s2 = inlined_call_operand.hbm [shape: f32[128,256], index: 2, kind: input, shape index: {}]
  %s3 = inlined_call_operand.vmem [shape: f32[1,256], index: 3, kind: input, shape index: {}]
  %s4 = inlined_call_operand.vmem [shape: f32[1,256], index: 4, kind: input, shape index: {}]
  %s5 = inlined_call_operand.hbm [shape: f32[256,128], index: 5, kind: input, shape index: {}]
  %s6 = inlined_call_operand.hbm [shape: f32[128,256], index: 6, kind: input, shape index: {}]
  %s7 = inlined_call_operand.vmem [shape: f32[1,256], index: 7, kind: input, shape index: {}]
  %s8 = inlined_call_operand.vmem [shape: f32[1,256], index: 8, kind: input, shape index: {}]
  %s9 = inlined_call_operand.hbm [shape: f32[256,128], index: 9, kind: input, shape index: {}]
  %s10 = inlined_call_operand.vmem [shape: f32[1,128], index: 10, kind: output, shape index: {}]
  %s11 = sld [smem:[#allocation0]]
  $region97: #{moco_forward.1} parent=0
    _
  %s13 = ssub.s32 1, %s11
  %s14 = scalar_select 0, %s13, %s11
  $region1: #{moco_forward.1} parent=0
    #allocation4 [shape = 'u8[131072]{0}', space=vmem, size = 0x20000, scoped, tag = 'input window, operand 2, single buffered']
    #allocation5 [shape = 's32[2]{0}', space=sflag, size = 0x8, scoped, tag = 'scoped memory for moco_forward.1']
    #allocation6 [shape = 'u8[131072]{0}', space=vmem, size = 0x20000, scoped, tag = 'input window, operand 5, single buffered']
    #allocation7 [shape = 's32[1]{0}', space=sflag, size = 0x4, scoped, tag = 'scoped memory for moco_forward.1']
    #allocation8 [shape = 'u8[131072]{0}', space=vmem, size = 0x20000, scoped, tag = 'input window, operand 6, single buffered']
    #allocation9 [shape = 'u8[131072]{0}', space=vmem, size = 0x20000, scoped, tag = 'input window, operand 9, single buffered']
    #allocation10 [shape = 's32[1]{0}', space=sflag, size = 0x4, scoped, tag = 'scoped memory for moco_forward.1']
    %15 = vsyncpa [#allocation5], 0
    %16 = vsyncpa [#allocation7], 0
    %17 = vsyncpa [#allocation10], 0
    loop: start=0, step=1, limit=4
    $region2: #{moco_forward.1} parent=1 // loop_pre_header
      _
    $region3: #{moco_forward.1} parent=1 // loop_header
      %s19 = sphi 0, %s23
      %p20 = scmp.ge.s32.totalorder %s19, 4
      %s29 = sphi 0, %s31
      %s32 = sphi 0, %s29
      %s33 = sphi 0, %s32
      %s49 = sphi 0, %s33
      %s53 = sphi 0, %s53
      %s55 = sphi 0, %s53
      %s56 = sphi 0, %s55
      %s70 = sphi 0, %s56
      %s74 = sphi 0, %s74
      %s76 = sphi 0, %s74
      %s77 = sphi 0, %s76
      %s91 = sphi 0, %s77
      %s95 = sphi 0, %s95
      %s97 = sphi 0, %s95
      %s98 = sphi 0, %s97
      %s112 = sphi 0, %s98
      %s116 = sphi 0, %s116
      %s118 = sphi 0, %s116
      %s119 = sphi 0, %s118
      %s133 = sphi 0, %s119
      %s137 = sphi 0, %s137
      %s139 = sphi 0, %s137
      %s140 = sphi 0, %s139
      %s154 = sphi 0, %s140
      %s158 = sphi 0, %s158
      %s160 = sphi 0, %s158
      %s161 = sphi 0, %s160
      %s175 = sphi 0, %s161
      %s179 = sphi 0, %s179
      %s181 = sphi 0, %s179
      %s182 = sphi 0, %s181
      %s196 = sphi 0, %s182
      %s200 = sphi 0, %s200
      %s202 = sphi 0, %s200
      %s203 = sphi 0, %s202
      %s217 = sphi 0, %s203
      %s221 = sphi 0, %s221
      %s223 = sphi 0, %s221
      %s224 = sphi 0, %s223
      %s238 = sphi 0, %s224
      %s242 = sphi 0, %s242
      %s244 = sphi 0, %s242
      %s245 = sphi 0, %s244
      %s259 = sphi 0, %s245
    $region4: #{moco_forward.1} parent=1 // loop_header_branch
      %22 = sbr.rel (%p20) target = $region8
    $region5: #{moco_forward.1} parent=1 // loop_body
      %s24 = ssub.s32 %s19, 1
      %s25 = ssub.s32 %s19, 2
      %s26 = sadd.s32 %s19, 1
      %s27 = ssub.s32 %s19, %s26
      %p28 = scmp.eq.s32.totalorder %s27, 0
      %s30 = sadd.s32 %s29, 1
      %s31 = scalar_select %p28, %s29, %s30
      %p34 = pneg %p28
      %p35 = scmp.eq.s32.totalorder %s19, 1
      %p36 = por %p34, %p35
      %p37 = scmp.ne.s32.totalorder %s29, %s32
      %p38 = scmp.eq.s32.totalorder %s19, 0
      %p39 = por %p37, %p38
      %p40 = scmp.ne.s32.totalorder %s29, %s32
      %p41 = scmp.eq.s32.totalorder %s24, 1
      %p42 = por %p40, %p41
      %p43 = scmp.ne.s32.totalorder %s32, %s33
      %p44 = scmp.eq.s32.totalorder %s24, 0
      %p45 = por %p43, %p44
      %p46 = scmp.ne.s32.totalorder %s32, %s33
      %p47 = scmp.eq.s32.totalorder %s25, 1
      %p48 = por %p46, %p47
      %p50 = scmp.ne.s32.totalorder %s33, %s49
      %p51 = scmp.eq.s32.totalorder %s25, 0
      %p52 = por %p50, %p51
      %s54 = sadd.s32 %s53, 1
      %p57 = scmp.eq.s32.totalorder %s19, 1
      %p58 = scmp.ne.s32.totalorder %s53, %s55
      %p59 = scmp.eq.s32.totalorder %s19, 0
      %p60 = por %p58, %p59
      %p61 = scmp.ne.s32.totalorder %s53, %s55
      %p62 = scmp.eq.s32.totalorder %s24, 1
      %p63 = por %p61, %p62
      %p64 = scmp.ne.s32.totalorder %s55, %s56
      %p65 = scmp.eq.s32.totalorder %s24, 0
      %p66 = por %p64, %p65
      %p67 = scmp.ne.s32.totalorder %s55, %s56
      %p68 = scmp.eq.s32.totalorder %s25, 1
      %p69 = por %p67, %p68
      %p71 = scmp.ne.s32.totalorder %s56, %s70
      %p72 = scmp.eq.s32.totalorder %s25, 0
      %p73 = por %p71, %p72
      %s75 = sadd.s32 %s74, 1
      %p78 = scmp.eq.s32.totalorder %s19, 1
      %p79 = scmp.ne.s32.totalorder %s74, %s76
      %p80 = scmp.eq.s32.totalorder %s19, 0
      %p81 = por %p79, %p80
      %p82 = scmp.ne.s32.totalorder %s74, %s76
      %p83 = scmp.eq.s32.totalorder %s24, 1
      %p84 = por %p82, %p83
      %p85 = scmp.ne.s32.totalorder %s76, %s77
      %p86 = scmp.eq.s32.totalorder %s24, 0
      %p87 = por %p85, %p86
      %p88 = scmp.ne.s32.totalorder %s76, %s77
      %p89 = scmp.eq.s32.totalorder %s25, 1
      %p90 = por %p88, %p89
      %p92 = scmp.ne.s32.totalorder %s77, %s91
      %p93 = scmp.eq.s32.totalorder %s25, 0
      %p94 = por %p92, %p93
      %s96 = sadd.s32 %s95, 1
      %p99 = scmp.eq.s32.totalorder %s19, 1
      %p100 = scmp.ne.s32.totalorder %s95, %s97
      %p101 = scmp.eq.s32.totalorder %s19, 0
      %p102 = por %p100, %p101
      %p103 = scmp.ne.s32.totalorder %s95, %s97
      %p104 = scmp.eq.s32.totalorder %s24, 1
      %p105 = por %p103, %p104
      %p106 = scmp.ne.s32.totalorder %s97, %s98
      %p107 = scmp.eq.s32.totalorder %s24, 0
      %p108 = por %p106, %p107
      %p109 = scmp.ne.s32.totalorder %s97, %s98
      %p110 = scmp.eq.s32.totalorder %s25, 1
      %p111 = por %p109, %p110
      %p113 = scmp.ne.s32.totalorder %s98, %s112
      %p114 = scmp.eq.s32.totalorder %s25, 0
      %p115 = por %p113, %p114
      %s117 = sadd.s32 %s116, 1
      %p120 = scmp.eq.s32.totalorder %s19, 1
      %p121 = scmp.ne.s32.totalorder %s116, %s118
      %p122 = scmp.eq.s32.totalorder %s19, 0
      %p123 = por %p121, %p122
      %p124 = scmp.ne.s32.totalorder %s116, %s118
      %p125 = scmp.eq.s32.totalorder %s24, 1
      %p126 = por %p124, %p125
      %p127 = scmp.ne.s32.totalorder %s118, %s119
      %p128 = scmp.eq.s32.totalorder %s24, 0
      %p129 = por %p127, %p128
      %p130 = scmp.ne.s32.totalorder %s118, %s119
      %p131 = scmp.eq.s32.totalorder %s25, 1
      %p132 = por %p130, %p131
      %p134 = scmp.ne.s32.totalorder %s119, %s133
      %p135 = scmp.eq.s32.totalorder %s25, 0
      %p136 = por %p134, %p135
      %s138 = sadd.s32 %s137, 1
      %p141 = scmp.eq.s32.totalorder %s19, 1
      %p142 = scmp.ne.s32.totalorder %s137, %s139
      %p143 = scmp.eq.s32.totalorder %s19, 0
      %p144 = por %p142, %p143
      %p145 = scmp.ne.s32.totalorder %s137, %s139
      %p146 = scmp.eq.s32.totalorder %s24, 1
      %p147 = por %p145, %p146
      %p148 = scmp.ne.s32.totalorder %s139, %s140
      %p149 = scmp.eq.s32.totalorder %s24, 0
      %p150 = por %p148, %p149
      %p151 = scmp.ne.s32.totalorder %s139, %s140
      %p152 = scmp.eq.s32.totalorder %s25, 1
      %p153 = por %p151, %p152
      %p155 = scmp.ne.s32.totalorder %s140, %s154
      %p156 = scmp.eq.s32.totalorder %s25, 0
      %p157 = por %p155, %p156
      %s159 = sadd.s32 %s158, 1
      %p162 = scmp.eq.s32.totalorder %s19, 1
      %p163 = scmp.ne.s32.totalorder %s158, %s160
      %p164 = scmp.eq.s32.totalorder %s19, 0
      %p165 = por %p163, %p164
      %p166 = scmp.ne.s32.totalorder %s158, %s160
      %p167 = scmp.eq.s32.totalorder %s24, 1
      %p168 = por %p166, %p167
      %p169 = scmp.ne.s32.totalorder %s160, %s161
      %p170 = scmp.eq.s32.totalorder %s24, 0
      %p171 = por %p169, %p170
      %p172 = scmp.ne.s32.totalorder %s160, %s161
      %p173 = scmp.eq.s32.totalorder %s25, 1
      %p174 = por %p172, %p173
      %p176 = scmp.ne.s32.totalorder %s161, %s175
      %p177 = scmp.eq.s32.totalorder %s25, 0
      %p178 = por %p176, %p177
      %s180 = sadd.s32 %s179, 1
      %p183 = scmp.eq.s32.totalorder %s19, 1
      %p184 = scmp.ne.s32.totalorder %s179, %s181
      %p185 = scmp.eq.s32.totalorder %s19, 0
      %p186 = por %p184, %p185
      %p187 = scmp.ne.s32.totalorder %s179, %s181
      %p188 = scmp.eq.s32.totalorder %s24, 1
      %p189 = por %p187, %p188
      %p190 = scmp.ne.s32.totalorder %s181, %s182
      %p191 = scmp.eq.s32.totalorder %s24, 0
      %p192 = por %p190, %p191
      %p193 = scmp.ne.s32.totalorder %s181, %s182
      %p194 = scmp.eq.s32.totalorder %s25, 1
      %p195 = por %p193, %p194
      %p197 = scmp.ne.s32.totalorder %s182, %s196
      %p198 = scmp.eq.s32.totalorder %s25, 0
      %p199 = por %p197, %p198
      %s201 = sadd.s32 %s200, 1
      %p204 = scmp.eq.s32.totalorder %s19, 1
      %p205 = scmp.ne.s32.totalorder %s200, %s202
      %p206 = scmp.eq.s32.totalorder %s19, 0
      %p207 = por %p205, %p206
      %p208 = scmp.ne.s32.totalorder %s200, %s202
      %p209 = scmp.eq.s32.totalorder %s24, 1
      %p210 = por %p208, %p209
      %p211 = scmp.ne.s32.totalorder %s202, %s203
      %p212 = scmp.eq.s32.totalorder %s24, 0
      %p213 = por %p211, %p212
      %p214 = scmp.ne.s32.totalorder %s202, %s203
      %p215 = scmp.eq.s32.totalorder %s25, 1
      %p216 = por %p214, %p215
      %p218 = scmp.ne.s32.totalorder %s203, %s217
      %p219 = scmp.eq.s32.totalorder %s25, 0
      %p220 = por %p218, %p219
      %s222 = sadd.s32 %s221, 1
      %p225 = scmp.eq.s32.totalorder %s19, 1
      %p226 = scmp.ne.s32.totalorder %s221, %s223
      %p227 = scmp.eq.s32.totalorder %s19, 0
      %p228 = por %p226, %p227
      %p229 = scmp.ne.s32.totalorder %s221, %s223
      %p230 = scmp.eq.s32.totalorder %s24, 1
      %p231 = por %p229, %p230
      %p232 = scmp.ne.s32.totalorder %s223, %s224
      %p233 = scmp.eq.s32.totalorder %s24, 0
      %p234 = por %p232, %p233
      %p235 = scmp.ne.s32.totalorder %s223, %s224
      %p236 = scmp.eq.s32.totalorder %s25, 1
      %p237 = por %p235, %p236
      %p239 = scmp.ne.s32.totalorder %s224, %s238
      %p240 = scmp.eq.s32.totalorder %s25, 0
      %p241 = por %p239, %p240
      %s243 = sadd.s32 %s242, 1
      %p246 = scmp.eq.s32.totalorder %s19, 1
      %p247 = scmp.ne.s32.totalorder %s242, %s244
      %p248 = scmp.eq.s32.totalorder %s19, 0
      %p249 = por %p247, %p248
      %p250 = scmp.ne.s32.totalorder %s242, %s244
      %p251 = scmp.eq.s32.totalorder %s24, 1
      %p252 = por %p250, %p251
      %p253 = scmp.ne.s32.totalorder %s244, %s245
      %p254 = scmp.eq.s32.totalorder %s24, 0
      %p255 = por %p253, %p254
      %p256 = scmp.ne.s32.totalorder %s244, %s245
      %p257 = scmp.eq.s32.totalorder %s25, 1
      %p258 = por %p256, %p257
      %p260 = scmp.ne.s32.totalorder %s245, %s259
      %p261 = scmp.eq.s32.totalorder %s25, 0
      %p262 = por %p260, %p261
      %p263 = scmp.le.s32.totalorder 1, %s19
      %p264 = scmp.lt.s32.totalorder %s19, 3
      %p265 = pnand %p263, %p264
      %p266 = pneg %p265
      // Predicated region
      $region9: #{moco_forward.1} parent=5 // pred_check
        _
      $region10: #{moco_forward.1} parent=5 // pred_check_branch
        %268 = sbr.rel (%p265) target = $region12
      $region11: #{moco_forward.1} parent=5 // pred_region
        %s269 = ssub.s32 %s19, 1
        // Predicated region
        $region13: #{moco_forward.1} parent=11 // pred_check
          %p270 = pneg %p66
        $region14: #{moco_forward.1} parent=11 // pred_check_branch
          %272 = sbr.rel (%p270) target = $region16
        $region15: #{moco_forward.1} parent=11 // pred_region
          _
        $region16: #{moco_forward.1} parent=11 // pred_fallthru
          _
        // Predicated region
        $region17: #{moco_forward.1} parent=11 // pred_check
          %p273 = pneg %p87
        $region18: #{moco_forward.1} parent=11 // pred_check_branch
          %275 = sbr.rel (%p273) target = $region20
        $region19: #{moco_forward.1} parent=11 // pred_region
          %s277 = ssub.s32 4096, 4096
          %278 = vsyncadd [#allocation5], %s277
          %s279 = sshll.u32 [#allocation4], 4
          %s280 = int_to_ptr.vmem [resolvable:$true] %s279
          %285 = dma.hbm_to_vmem [thread:$0]  %s2, 4096, %s280, [#allocation5], 256, 256, 16
        $region20: #{moco_forward.1} parent=11 // pred_fallthru
          _
        // Predicated region
        $region21: #{moco_forward.1} parent=11 // pred_check
          %p286 = pneg %p108
        $region22: #{moco_forward.1} parent=11 // pred_check_branch
          %288 = sbr.rel (%p286) target = $region24
        $region23: #{moco_forward.1} parent=11 // pred_region
          _
        $region24: #{moco_forward.1} parent=11 // pred_fallthru
          _
        // Predicated region
        $region25: #{moco_forward.1} parent=11 // pred_check
          %p289 = pneg %p129
        $region26: #{moco_forward.1} parent=11 // pred_check_branch
          %291 = sbr.rel (%p289) target = $region28
        $region27: #{moco_forward.1} parent=11 // pred_region
          _
        $region28: #{moco_forward.1} parent=11 // pred_fallthru
          _
        // Predicated region
        $region29: #{moco_forward.1} parent=11 // pred_check
          %p292 = pneg %p150
        $region30: #{moco_forward.1} parent=11 // pred_check_branch
          %294 = sbr.rel (%p292) target = $region32
        $region31: #{moco_forward.1} parent=11 // pred_region
          %s296 = ssub.s32 4096, 4096
          %297 = vsyncadd [#allocation7], %s296
          %s298 = sshll.u32 [#allocation6], 4
          %s299 = int_to_ptr.vmem [resolvable:$true] %s298
          %304 = dma.hbm_to_vmem [thread:$0]  %s5, 4096, %s299, [#allocation7], 128, 128, 8
        $region32: #{moco_forward.1} parent=11 // pred_fallthru
          _
        // Predicated region
        $region33: #{moco_forward.1} parent=11 // pred_check
          %p305 = pneg %p171
        $region34: #{moco_forward.1} parent=11 // pred_check_branch
          %307 = sbr.rel (%p305) target = $region36
        $region35: #{moco_forward.1} parent=11 // pred_region
          %s309 = ssub.s32 4096, 4096
          %310 = vsyncadd [#allocation7], %s309
          %s311 = sshll.u32 [#allocation8], 4
          %s312 = int_to_ptr.vmem [resolvable:$true] %s311
          %317 = dma.hbm_to_vmem [thread:$0]  %s6, 4096, %s312, [#allocation7], 256, 256, 16
        $region36: #{moco_forward.1} parent=11 // pred_fallthru
          _
        // Predicated region
        $region37: #{moco_forward.1} parent=11 // pred_check
          %p318 = pneg %p192
        $region38: #{moco_forward.1} parent=11 // pred_check_branch
          %320 = sbr.rel (%p318) target = $region40
        $region39: #{moco_forward.1} parent=11 // pred_region
          _
        $region40: #{moco_forward.1} parent=11 // pred_fallthru
          _
        // Predicated region
        $region41: #{moco_forward.1} parent=11 // pred_check
          %p321 = pneg %p213
        $region42: #{moco_forward.1} parent=11 // pred_check_branch
          %323 = sbr.rel (%p321) target = $region44
        $region43: #{moco_forward.1} parent=11 // pred_region
          _
        $region44: #{moco_forward.1} parent=11 // pred_fallthru
          _
        // Predicated region
        $region45: #{moco_forward.1} parent=11 // pred_check
          %p324 = pneg %p234
        $region46: #{moco_forward.1} parent=11 // pred_check_branch
          %326 = sbr.rel (%p324) target = $region48
        $region47: #{moco_forward.1} parent=11 // pred_region
          %s328 = ssub.s32 4096, 4096
          %329 = vsyncadd [#allocation10], %s328
          %s330 = sshll.u32 [#allocation9], 4
          %s331 = int_to_ptr.vmem [resolvable:$true] %s330
          %336 = dma.hbm_to_vmem [thread:$0]  %s9, 4096, %s331, [#allocation10], 128, 128, 8
        $region48: #{moco_forward.1} parent=11 // pred_fallthru
          _
      $region12: #{moco_forward.1} parent=5 // pred_fallthru
        _
      %p337 = scmp.lt.s32.totalorder %s19, 2
      // Predicated region
      $region49: #{moco_forward.1} parent=5 // pred_check
        %p338 = pneg %p337
      $region50: #{moco_forward.1} parent=5 // pred_check_branch
        %340 = sbr.rel (%p338) target = $region52
      $region51: #{moco_forward.1} parent=5 // pred_region
        // Predicated region
        $region53: #{moco_forward.1} parent=51 // pred_check
          %p341 = pneg %p39
        $region54: #{moco_forward.1} parent=51 // pred_check_branch
          %343 = sbr.rel (%p341) target = $region56
        $region55: #{moco_forward.1} parent=51 // pred_region
          %p344 = scmp.lt.s32.totalorder %s19, 1
          %s345 = scalar_select %p344, %s19, 1
          %s346 = smul.addr %s345, 2
          %s347 = smul.addr %s346, 8
          %s348 = scalar_lea.vmem %s0, %s347
        $region56: #{moco_forward.1} parent=51 // pred_fallthru
          _
      $region52: #{moco_forward.1} parent=5 // pred_fallthru
        _
      %p349 = scmp.le.s32.totalorder 1, %s19
      %p350 = scmp.lt.s32.totalorder %s19, 3
      %p351 = pnand %p349, %p350
      %p352 = pneg %p351
      // Predicated region
      $region57: #{moco_forward.1} parent=5 // pred_check
        _
      $region58: #{moco_forward.1} parent=5 // pred_check_branch
        %354 = sbr.rel (%p351) target = $region60
      $region59: #{moco_forward.1} parent=5 // pred_region
        %s355 = ssub.s32 %s19, 1
        // Predicated region
        $region61: #{moco_forward.1} parent=59 // pred_check
          %p356 = pneg %p87
        $region62: #{moco_forward.1} parent=59 // pred_check_branch
          %358 = sbr.rel (%p356) target = $region64
        $region63: #{moco_forward.1} parent=59 // pred_region
          %359 = dma.done [#allocation5], 4096
        $region64: #{moco_forward.1} parent=59 // pred_fallthru
          _
        // Predicated region
        $region65: #{moco_forward.1} parent=59 // pred_check
          %p360 = pneg %p150
        $region66: #{moco_forward.1} parent=59 // pred_check_branch
          %362 = sbr.rel (%p360) target = $region68
        $region67: #{moco_forward.1} parent=59 // pred_region
          %363 = dma.done [#allocation7], 4096
        $region68: #{moco_forward.1} parent=59 // pred_fallthru
          _
        // Predicated region
        $region69: #{moco_forward.1} parent=59 // pred_check
          %p364 = pneg %p171
        $region70: #{moco_forward.1} parent=59 // pred_check_branch
          %366 = sbr.rel (%p364) target = $region72
        $region71: #{moco_forward.1} parent=59 // pred_region
          %367 = dma.done [#allocation7], 4096
        $region72: #{moco_forward.1} parent=59 // pred_fallthru
          _
        // Predicated region
        $region73: #{moco_forward.1} parent=59 // pred_check
          %p368 = pneg %p234
        $region74: #{moco_forward.1} parent=59 // pred_check_branch
          %370 = sbr.rel (%p368) target = $region76
        $region75: #{moco_forward.1} parent=59 // pred_region
          %371 = dma.done [#allocation10], 4096
        $region76: #{moco_forward.1} parent=59 // pred_fallthru
          _
        %p372 = scmp.lt.s32.totalorder %s24, 1
        %s373 = scalar_select %p372, %s24, 1
        %s374 = smul.addr %s373, 2
        %s375 = smul.addr %s374, 8
        %s376 = scalar_lea.vmem %s0, %s375
        %p377 = pneg %p45
        %p378 = pneg %p42
        %p379 = pneg %p66
        %p380 = pneg %p63
        %p381 = pneg %p87
        %p382 = pneg %p84
        %p383 = pneg %p108
        %p384 = pneg %p105
        %p385 = pneg %p129
        %p386 = pneg %p126
        %p387 = pneg %p150
        %p388 = pneg %p147
        %p389 = pneg %p171
        %p390 = pneg %p168
        %p391 = pneg %p192
        %p392 = pneg %p189
        %p393 = pneg %p213
        %p394 = pneg %p210
        %p395 = pneg %p234
        %p396 = pneg %p231
        %p397 = pneg %p255
        %p398 = pneg %p252
        %p399 = scmp.lt.s32.totalorder %s24, 1
        %s400 = scalar_select %p399, %s24, 1
        %s401 = smul.addr %s400, 2
        %s402 = smul.addr %s401, 8
        %s403 = scalar_lea.vmem %s0, %s402
        %v404 = vld [vmem:[%s403] sm:$0xff]
        %v405 = vld [vmem:[%s403 + $0x8] sm:$0xff]
        %v406 = vld [vmem:[%s1] sm:$0xff]
        %v407 = vld [vmem:[%s1 + $0x8] sm:$0xff]
        %v408 = vld [vmem:[%s1 + $0x10] sm:$0xff]
        %v409 = vld [vmem:[%s1 + $0x18] sm:$0xff]
        %v410 = vld [vmem:[%s1 + $0x20] sm:$0xff]
        %v411 = vld [vmem:[%s1 + $0x28] sm:$0xff]
        %v412 = vld [vmem:[%s1 + $0x30] sm:$0xff]
        %v413 = vld [vmem:[%s1 + $0x38] sm:$0xff]
        %v414 = vld [vmem:[%s1 + $0x40] sm:$0xff]
        %v415 = vld [vmem:[%s1 + $0x48] sm:$0xff]
        %v416 = vld [vmem:[%s1 + $0x50] sm:$0xff]
        %v417 = vld [vmem:[%s1 + $0x58] sm:$0xff]
        %v418 = vld [vmem:[%s1 + $0x60] sm:$0xff]
        %v419 = vld [vmem:[%s1 + $0x68] sm:$0xff]
        %v420 = vld [vmem:[%s1 + $0x70] sm:$0xff]
        %v421 = vld [vmem:[%s1 + $0x78] sm:$0xff]
        %v422 = vld [vmem:[%s1 + $0x80] sm:$0xff]
        %v423 = vld [vmem:[%s1 + $0x88] sm:$0xff]
        %v424 = vld [vmem:[%s1 + $0x90] sm:$0xff]
        %v425 = vld [vmem:[%s1 + $0x98] sm:$0xff]
        %v426 = vld [vmem:[%s1 + $0xa0] sm:$0xff]
        %v427 = vld [vmem:[%s1 + $0xa8] sm:$0xff]
        %v428 = vld [vmem:[%s1 + $0xb0] sm:$0xff]
        %v429 = vld [vmem:[%s1 + $0xb8] sm:$0xff]
        %v430 = vld [vmem:[%s1 + $0xc0] sm:$0xff]
        %v431 = vld [vmem:[%s1 + $0xc8] sm:$0xff]
        %v432 = vld [vmem:[%s1 + $0xd0] sm:$0xff]
        %v433 = vld [vmem:[%s1 + $0xd8] sm:$0xff]
        %v434 = vld [vmem:[%s1 + $0xe0] sm:$0xff]
        %v435 = vld [vmem:[%s1 + $0xe8] sm:$0xff]
        %v436 = vld [vmem:[%s1 + $0xf0] sm:$0xff]
        %v437 = vld [vmem:[%s1 + $0xf8] sm:$0xff]
        %438 = vmatprep.subr.mxu0 0.0
        %439 = vmatpush1.msra.mxu0 %v406
        %440 = vmatprep.subr.mxu0 0.0
        %441 = vmatpush1.msra.mxu0 %v407
        %442 = vmatprep.subr.mxu0 0.0
        %443 = vmatpush1.msra.mxu0 %v408
        %444 = vmatprep.subr.mxu0 0.0
        %445 = vmatpush1.msra.mxu0 %v409
        %446 = vmatprep.subr.mxu0 0.0
        %447 = vmatpush1.msra.mxu0 %v410
        %448 = vmatprep.subr.mxu0 0.0
        %449 = vmatpush1.msra.mxu0 %v411
        %450 = vmatprep.subr.mxu0 0.0
        %451 = vmatpush1.msra.mxu0 %v412
        %452 = vmatprep.subr.mxu0 0.0
        %453 = vmatpush1.msra.mxu0 %v413
        %454 = vmatprep.subr.mxu0 0.0
        %455 = vmatpush1.msra.mxu0 %v414
        %456 = vmatprep.subr.mxu0 0.0
        %457 = vmatpush1.msra.mxu0 %v415
        %458 = vmatprep.subr.mxu0 0.0
        %459 = vmatpush1.msra.mxu0 %v416
        %460 = vmatprep.subr.mxu0 0.0
        %461 = vmatpush1.msra.mxu0 %v417
        %462 = vmatprep.subr.mxu0 0.0
        %463 = vmatpush1.msra.mxu0 %v418
        %464 = vmatprep.subr.mxu0 0.0
        %465 = vmatpush1.msra.mxu0 %v419
        %466 = vmatprep.subr.mxu0 0.0
        %467 = vmatpush1.msra.mxu0 %v420
        %468 = vmatprep.subr.mxu0 0.0
        %469 = vmatpush1.msra.mxu0 %v421
        %470 = vmatprep.subr.mxu0 0.0
        %471 = vmatpush1.msra.mxu0 %v422
        %472 = vmatprep.subr.mxu0 0.0
        %473 = vmatpush1.msra.mxu0 %v423
        %474 = vmatprep.subr.mxu0 0.0
        %475 = vmatpush1.msra.mxu0 %v424
        %476 = vmatprep.subr.mxu0 0.0
        %477 = vmatpush1.msra.mxu0 %v425
        %478 = vmatprep.subr.mxu0 0.0
        %479 = vmatpush1.msra.mxu0 %v426
        %480 = vmatprep.subr.mxu0 0.0
        %481 = vmatpush1.msra.mxu0 %v427
        %482 = vmatprep.subr.mxu0 0.0
        %483 = vmatpush1.msra.mxu0 %v428
        %484 = vmatprep.subr.mxu0 0.0
        %485 = vmatpush1.msra.mxu0 %v429
        %486 = vmatprep.subr.mxu0 0.0
        %487 = vmatpush1.msra.mxu0 %v430
        %488 = vmatprep.subr.mxu0 0.0
        %489 = vmatpush1.msra.mxu0 %v431
        %490 = vmatprep.subr.mxu0 0.0
        %491 = vmatpush1.msra.mxu0 %v432
        %492 = vmatprep.subr.mxu0 0.0
        %493 = vmatpush1.msra.mxu0 %v433
        %494 = vmatprep.subr.mxu0 0.0
        %495 = vmatpush1.msra.mxu0 %v434
        %496 = vmatprep.subr.mxu0 0.0
        %497 = vmatpush1.msra.mxu0 %v435
        %498 = vmatprep.subr.mxu0 0.0
        %499 = vmatpush1.msra.mxu0 %v436
        %500 = vmatprep.subr.mxu0 0.0
        %501 = vmatpush1.msra.mxu0 %v437
        %502 = vmatprep.mubr.f32.mxu0 %v405
        %503 = vmatmul.mubr.f32.gmra.mrb[0].mxu0 %v404
        %v504 = vpop.f32.mrb[0].mxu0
        %v505 = vadd.f32 0.0, %v504
        %v506 = vpop.f32.mrb[0].mxu0
        %507 = vdwg.mxu0
        %v508 = vld [vmem:[#allocation4] sm:$0xff]
        %v509 = vld [vmem:[#allocation4 + $0x8] sm:$0xff]
        %v510 = vld [vmem:[#allocation4 + $0x10] sm:$0xff]
        %v511 = vld [vmem:[#allocation4 + $0x18] sm:$0xff]
        %v512 = vld [vmem:[#allocation4 + $0x20] sm:$0xff]
        %v513 = vld [vmem:[#allocation4 + $0x28] sm:$0xff]
        %v514 = vld [vmem:[#allocation4 + $0x30] sm:$0xff]
        %v515 = vld [vmem:[#allocation4 + $0x38] sm:$0xff]
        %v516 = vld [vmem:[#allocation4 + $0x40] sm:$0xff]
        %v517 = vld [vmem:[#allocation4 + $0x48] sm:$0xff]
        %v518 = vld [vmem:[#allocation4 + $0x50] sm:$0xff]
        %v519 = vld [vmem:[#allocation4 + $0x58] sm:$0xff]
        %v520 = vld [vmem:[#allocation4 + $0x60] sm:$0xff]
        %v521 = vld [vmem:[#allocation4 + $0x68] sm:$0xff]
        %v522 = vld [vmem:[#allocation4 + $0x70] sm:$0xff]
        %v523 = vld [vmem:[#allocation4 + $0x78] sm:$0xff]
        %v524 = vld [vmem:[#allocation4 + $0x80] sm:$0xff]
        %v525 = vld [vmem:[#allocation4 + $0x88] sm:$0xff]
        %v526 = vld [vmem:[#allocation4 + $0x90] sm:$0xff]
        %v527 = vld [vmem:[#allocation4 + $0x98] sm:$0xff]
        %v528 = vld [vmem:[#allocation4 + $0xa0] sm:$0xff]
        %v529 = vld [vmem:[#allocation4 + $0xa8] sm:$0xff]
        %v530 = vld [vmem:[#allocation4 + $0xb0] sm:$0xff]
        %v531 = vld [vmem:[#allocation4 + $0xb8] sm:$0xff]
        %v532 = vld [vmem:[#allocation4 + $0xc0] sm:$0xff]
        %v533 = vld [vmem:[#allocation4 + $0xc8] sm:$0xff]
        %v534 = vld [vmem:[#allocation4 + $0xd0] sm:$0xff]
        %v535 = vld [vmem:[#allocation4 + $0xd8] sm:$0xff]
        %v536 = vld [vmem:[#allocation4 + $0xe0] sm:$0xff]
        %v537 = vld [vmem:[#allocation4 + $0xe8] sm:$0xff]
        %v538 = vld [vmem:[#allocation4 + $0xf0] sm:$0xff]
        %v539 = vld [vmem:[#allocation4 + $0xf8] sm:$0xff]
        %v540 = vld [vmem:[%s3] sm:$0x3]
        %v541 = vld [vmem:[%s4] sm:$0x3]
        %v542 = vld [vmem:[#allocation6] sm:$0xff]
        %v543 = vld [vmem:[#allocation6 + $0x8] sm:$0xff]
        %v544 = vld [vmem:[#allocation6 + $0x10] sm:$0xff]
        %v545 = vld [vmem:[#allocation6 + $0x18] sm:$0xff]
        %v546 = vld [vmem:[#allocation6 + $0x20] sm:$0xff]
        %v547 = vld [vmem:[#allocation6 + $0x28] sm:$0xff]
        %v548 = vld [vmem:[#allocation6 + $0x30] sm:$0xff]
        %v549 = vld [vmem:[#allocation6 + $0x38] sm:$0xff]
        %v550 = vld [vmem:[#allocation6 + $0x40] sm:$0xff]
        %v551 = vld [vmem:[#allocation6 + $0x48] sm:$0xff]
        %v552 = vld [vmem:[#allocation6 + $0x50] sm:$0xff]
        %v553 = vld [vmem:[#allocation6 + $0x58] sm:$0xff]
        %v554 = vld [vmem:[#allocation6 + $0x60] sm:$0xff]
        %v555 = vld [vmem:[#allocation6 + $0x68] sm:$0xff]
        %v556 = vld [vmem:[#allocation6 + $0x70] sm:$0xff]
        %v557 = vld [vmem:[#allocation6 + $0x78] sm:$0xff]
        %v558 = vld [vmem:[#allocation6 + $0x80] sm:$0xff]
        %v559 = vld [vmem:[#allocation6 + $0x88] sm:$0xff]
        %v560 = vld [vmem:[#allocation6 + $0x90] sm:$0xff]
        %v561 = vld [vmem:[#allocation6 + $0x98] sm:$0xff]
        %v562 = vld [vmem:[#allocation6 + $0xa0] sm:$0xff]
        %v563 = vld [vmem:[#allocation6 + $0xa8] sm:$0xff]
        %v564 = vld [vmem:[#allocation6 + $0xb0] sm:$0xff]
        %v565 = vld [vmem:[#allocation6 + $0xb8] sm:$0xff]
        %v566 = vld [vmem:[#allocation6 + $0xc0] sm:$0xff]
        %v567 = vld [vmem:[#allocation6 + $0xc8] sm:$0xff]
        %v568 = vld [vmem:[#allocation6 + $0xd0] sm:$0xff]
        %v569 = vld [vmem:[#allocation6 + $0xd8] sm:$0xff]
        %v570 = vld [vmem:[#allocation6 + $0xe0] sm:$0xff]
        %v571 = vld [vmem:[#allocation6 + $0xe8] sm:$0xff]
        %v572 = vld [vmem:[#allocation6 + $0xf0] sm:$0xff]
        %v573 = vld [vmem:[#allocation6 + $0xf8] sm:$0xff]
        %574 = vmatprep.subr.mxu0 %v509
        %575 = vmatpush1.msra.mxu0 %v508
        %576 = vmatprep.subr.mxu0 %v511
        %577 = vmatpush1.msra.mxu0 %v510
        %578 = vmatprep.subr.mxu0 %v513
        %579 = vmatpush1.msra.mxu0 %v512
        %580 = vmatprep.subr.mxu0 %v515
        %581 = vmatpush1.msra.mxu0 %v514
        %582 = vmatprep.subr.mxu0 %v517
        %583 = vmatpush1.msra.mxu0 %v516
        %584 = vmatprep.subr.mxu0 %v519
        %585 = vmatpush1.msra.mxu0 %v518
        %586 = vmatprep.subr.mxu0 %v521
        %587 = vmatpush1.msra.mxu0 %v520
        %588 = vmatprep.subr.mxu0 %v523
        %589 = vmatpush1.msra.mxu0 %v522
        %590 = vmatprep.subr.mxu0 %v525
        %591 = vmatpush1.msra.mxu0 %v524
        %592 = vmatprep.subr.mxu0 %v527
        %593 = vmatpush1.msra.mxu0 %v526
        %594 = vmatprep.subr.mxu0 %v529
        %595 = vmatpush1.msra.mxu0 %v528
        %596 = vmatprep.subr.mxu0 %v531
        %597 = vmatpush1.msra.mxu0 %v530
        %598 = vmatprep.subr.mxu0 %v533
        %599 = vmatpush1.msra.mxu0 %v532
        %600 = vmatprep.subr.mxu0 %v535
        %601 = vmatpush1.msra.mxu0 %v534
        %602 = vmatprep.subr.mxu0 %v537
        %603 = vmatpush1.msra.mxu0 %v536
        %604 = vmatprep.subr.mxu0 %v539
        %605 = vmatpush1.msra.mxu0 %v538
        %606 = vmatprep.subr.mxu0 0.0
        %607 = vmatpush1.msra.mxu0 0.0
        %608 = vmatprep.subr.mxu0 0.0
        %609 = vmatpush1.msra.mxu0 0.0
        %610 = vmatprep.subr.mxu0 0.0
        %611 = vmatpush1.msra.mxu0 0.0
        %612 = vmatprep.subr.mxu0 0.0
        %613 = vmatpush1.msra.mxu0 0.0
        %614 = vmatprep.subr.mxu0 0.0
        %615 = vmatpush1.msra.mxu0 0.0
        %616 = vmatprep.subr.mxu0 0.0
        %617 = vmatpush1.msra.mxu0 0.0
        %618 = vmatprep.subr.mxu0 0.0
        %619 = vmatpush1.msra.mxu0 0.0
        %620 = vmatprep.subr.mxu0 0.0
        %621 = vmatpush1.msra.mxu0 0.0
        %622 = vmatprep.subr.mxu0 0.0
        %623 = vmatpush1.msra.mxu0 0.0
        %624 = vmatprep.subr.mxu0 0.0
        %625 = vmatpush1.msra.mxu0 0.0
        %626 = vmatprep.subr.mxu0 0.0
        %627 = vmatpush1.msra.mxu0 0.0
        %628 = vmatprep.subr.mxu0 0.0
        %629 = vmatpush1.msra.mxu0 0.0
        %630 = vmatprep.subr.mxu0 0.0
        %631 = vmatpush1.msra.mxu0 0.0
        %632 = vmatprep.subr.mxu0 0.0
        %633 = vmatpush1.msra.mxu0 0.0
        %634 = vmatprep.subr.mxu0 0.0
        %635 = vmatpush1.msra.mxu0 0.0
        %636 = vmatprep.subr.mxu0 0.0
        %637 = vmatpush1.msra.mxu0 0.0
        %638 = vmatprep.mubr.f32.mxu0 0.0
        %639 = vmatmul.mubr.f32.gmra.mrb[0].mxu0 %v505
        %v640 = vpop.f32.mrb[0].mxu0
        %v641 = vadd.f32 0.0, %v640
        %v642 = vpop.f32.mrb[0].mxu0
        %v643 = vadd.f32 0.0, %v642
        %644 = vdwg.mxu0
        %v645 = vrot.slane %v641, 4
        %v646 = vadd.f32 %v641, %v645
        %v647 = vrot.slane %v646, 2
        %v648 = vadd.f32 %v646, %v647
        %v649 = vrot.slane %v648, 1
        %v650 = vadd.f32 %v648, %v649
        %v651 = vrot.slane %v643, 4
        %v652 = vadd.f32 %v643, %v651
        %v653 = vrot.slane %v652, 2
        %v654 = vadd.f32 %v652, %v653
        %v655 = vrot.slane %v654, 1
        %v656 = vadd.f32 %v654, %v655
        %v657 = vrcp.pop 8.0
        %v658 = vmul.f32 %v650, %v657
        %v659 = vmul.f32 %v656, %v657
        %v660 = vsub.f32 %v641, %v658
        %v661 = vsub.f32 %v643, %v659
        %v662 = vmul.f32 %v660, %v660
        %v663 = vmul.f32 %v661, %v661
        %v664 = vrot.slane %v662, 4
        %v665 = vadd.f32 %v662, %v664
        %v666 = vrot.slane %v665, 2
        %v667 = vadd.f32 %v665, %v666
        %v668 = vrot.slane %v667, 1
        %v669 = vadd.f32 %v667, %v668
        %v670 = vrot.slane %v663, 4
        %v671 = vadd.f32 %v663, %v670
        %v672 = vrot.slane %v671, 2
        %v673 = vadd.f32 %v671, %v672
        %v674 = vrot.slane %v673, 1
        %v675 = vadd.f32 %v673, %v674
        %v676 = vmul.f32 %v669, %v657
        %v677 = vmul.f32 %v675, %v657
        %v678 = vadd.f32 %v676, 1e-05
        %v679 = vadd.f32 %v677, 1e-05
        %v680 = vrsqrt.pop %v678
        %v681 = vrsqrt.pop %v679
        %v682 = vmul.f32 %v660, %v680
        %v683 = vmul.f32 %v661, %v681
        %v685 = vlaneseq
        %v686 = vshrl.u32 %v685, 7
        %v687 = vsub.s32 0, %v686
        %v688 = vrot.slane %v540, %v687
        %v689 = vlaneseq
        %v690 = vshrl.u32 %v689, 7
        %v691 = vsub.s32 1, %v690
        %v692 = vrot.slane %v540, %v691
        %v695 = vmul.f32 %v682, %v688
        %v696 = vmul.f32 %v683, %v692
        %v698 = vlaneseq
        %v699 = vshrl.u32 %v698, 7
        %v700 = vsub.s32 0, %v699
        %v701 = vrot.slane %v541, %v700
        %v702 = vlaneseq
        %v703 = vshrl.u32 %v702, 7
        %v704 = vsub.s32 1, %v703
        %v705 = vrot.slane %v541, %v704
        %v708 = vadd.f32 %v695, %v701
        %v709 = vadd.f32 %v696, %v705
        %v710 = vmax.f32 %v708, 0.0
        %v711 = vmax.f32 %v709, 0.0
        %712 = vmatprep.subr.mxu0 0.0
        %713 = vmatpush1.msra.mxu0 %v542
        %714 = vmatprep.subr.mxu0 0.0
        %715 = vmatpush1.msra.mxu0 %v543
        %716 = vmatprep.subr.mxu0 0.0
        %717 = vmatpush1.msra.mxu0 %v544
        %718 = vmatprep.subr.mxu0 0.0
        %719 = vmatpush1.msra.mxu0 %v545
        %720 = vmatprep.subr.mxu0 0.0
        %721 = vmatpush1.msra.mxu0 %v546
        %722 = vmatprep.subr.mxu0 0.0
        %723 = vmatpush1.msra.mxu0 %v547
        %724 = vmatprep.subr.mxu0 0.0
        %725 = vmatpush1.msra.mxu0 %v548
        %726 = vmatprep.subr.mxu0 0.0
        %727 = vmatpush1.msra.mxu0 %v549
        %728 = vmatprep.subr.mxu0 0.0
        %729 = vmatpush1.msra.mxu0 %v550
        %730 = vmatprep.subr.mxu0 0.0
        %731 = vmatpush1.msra.mxu0 %v551
        %732 = vmatprep.subr.mxu0 0.0
        %733 = vmatpush1.msra.mxu0 %v552
        %734 = vmatprep.subr.mxu0 0.0
        %735 = vmatpush1.msra.mxu0 %v553
        %736 = vmatprep.subr.mxu0 0.0
        %737 = vmatpush1.msra.mxu0 %v554
        %738 = vmatprep.subr.mxu0 0.0
        %739 = vmatpush1.msra.mxu0 %v555
        %740 = vmatprep.subr.mxu0 0.0
        %741 = vmatpush1.msra.mxu0 %v556
        %742 = vmatprep.subr.mxu0 0.0
        %743 = vmatpush1.msra.mxu0 %v557
        %744 = vmatprep.subr.mxu0 0.0
        %745 = vmatpush1.msra.mxu0 %v558
        %746 = vmatprep.subr.mxu0 0.0
        %747 = vmatpush1.msra.mxu0 %v559
        %748 = vmatprep.subr.mxu0 0.0
        %749 = vmatpush1.msra.mxu0 %v560
        %750 = vmatprep.subr.mxu0 0.0
        %751 = vmatpush1.msra.mxu0 %v561
        %752 = vmatprep.subr.mxu0 0.0
        %753 = vmatpush1.msra.mxu0 %v562
        %754 = vmatprep.subr.mxu0 0.0
        %755 = vmatpush1.msra.mxu0 %v563
        %756 = vmatprep.subr.mxu0 0.0
        %757 = vmatpush1.msra.mxu0 %v564
        %758 = vmatprep.subr.mxu0 0.0
        %759 = vmatpush1.msra.mxu0 %v565
        %760 = vmatprep.subr.mxu0 0.0
        %761 = vmatpush1.msra.mxu0 %v566
        %762 = vmatprep.subr.mxu0 0.0
        %763 = vmatpush1.msra.mxu0 %v567
        %764 = vmatprep.subr.mxu0 0.0
        %765 = vmatpush1.msra.mxu0 %v568
        %766 = vmatprep.subr.mxu0 0.0
        %767 = vmatpush1.msra.mxu0 %v569
        %768 = vmatprep.subr.mxu0 0.0
        %769 = vmatpush1.msra.mxu0 %v570
        %770 = vmatprep.subr.mxu0 0.0
        %771 = vmatpush1.msra.mxu0 %v571
        %772 = vmatprep.subr.mxu0 0.0
        %773 = vmatpush1.msra.mxu0 %v572
        %774 = vmatprep.subr.mxu0 0.0
        %775 = vmatpush1.msra.mxu0 %v573
        %776 = vmatprep.mubr.f32.mxu0 %v711
        %777 = vmatmul.mubr.f32.gmra.mrb[0].mxu0 %v710
        %v778 = vpop.f32.mrb[0].mxu0
        %v779 = vadd.f32 0.0, %v778
        %v780 = vpop.f32.mrb[0].mxu0
        %781 = vdwg.mxu0
        %v782 = vrot.slane %v779, 4
        %v783 = vadd.f32 %v779, %v782
        %v784 = vrot.slane %v783, 2
        %v785 = vadd.f32 %v783, %v784
        %v786 = vrot.slane %v785, 1
        %v787 = vadd.f32 %v785, %v786
        %v788 = vmul.f32 %v787, %v657
        %v789 = vsub.f32 %v779, %v788
        %v790 = vmul.f32 %v789, %v789
        %v791 = vrot.slane %v790, 4
        %v792 = vadd.f32 %v790, %v791
        %v793 = vrot.slane %v792, 2
        %v794 = vadd.f32 %v792, %v793
        %v795 = vrot.slane %v794, 1
        %v796 = vadd.f32 %v794, %v795
        %v797 = vmul.f32 %v796, %v657
        %v798 = vadd.f32 %v797, 1e-05
        %v799 = vrsqrt.pop %v798
        %v800 = vmul.f32 %v789, %v799
        %v801 = vld [vmem:[#allocation8] sm:$0xff]
        %v802 = vld [vmem:[#allocation8 + $0x8] sm:$0xff]
        %v803 = vld [vmem:[#allocation8 + $0x10] sm:$0xff]
        %v804 = vld [vmem:[#allocation8 + $0x18] sm:$0xff]
        %v805 = vld [vmem:[#allocation8 + $0x20] sm:$0xff]
        %v806 = vld [vmem:[#allocation8 + $0x28] sm:$0xff]
        %v807 = vld [vmem:[#allocation8 + $0x30] sm:$0xff]
        %v808 = vld [vmem:[#allocation8 + $0x38] sm:$0xff]
        %v809 = vld [vmem:[#allocation8 + $0x40] sm:$0xff]
        %v810 = vld [vmem:[#allocation8 + $0x48] sm:$0xff]
        %v811 = vld [vmem:[#allocation8 + $0x50] sm:$0xff]
        %v812 = vld [vmem:[#allocation8 + $0x58] sm:$0xff]
        %v813 = vld [vmem:[#allocation8 + $0x60] sm:$0xff]
        %v814 = vld [vmem:[#allocation8 + $0x68] sm:$0xff]
        %v815 = vld [vmem:[#allocation8 + $0x70] sm:$0xff]
        %v816 = vld [vmem:[#allocation8 + $0x78] sm:$0xff]
        %v817 = vld [vmem:[#allocation8 + $0x80] sm:$0xff]
        %v818 = vld [vmem:[#allocation8 + $0x88] sm:$0xff]
        %v819 = vld [vmem:[#allocation8 + $0x90] sm:$0xff]
        %v820 = vld [vmem:[#allocation8 + $0x98] sm:$0xff]
        %v821 = vld [vmem:[#allocation8 + $0xa0] sm:$0xff]
        %v822 = vld [vmem:[#allocation8 + $0xa8] sm:$0xff]
        %v823 = vld [vmem:[#allocation8 + $0xb0] sm:$0xff]
        %v824 = vld [vmem:[#allocation8 + $0xb8] sm:$0xff]
        %v825 = vld [vmem:[#allocation8 + $0xc0] sm:$0xff]
        %v826 = vld [vmem:[#allocation8 + $0xc8] sm:$0xff]
        %v827 = vld [vmem:[#allocation8 + $0xd0] sm:$0xff]
        %v828 = vld [vmem:[#allocation8 + $0xd8] sm:$0xff]
        %v829 = vld [vmem:[#allocation8 + $0xe0] sm:$0xff]
        %v830 = vld [vmem:[#allocation8 + $0xe8] sm:$0xff]
        %v831 = vld [vmem:[#allocation8 + $0xf0] sm:$0xff]
        %v832 = vld [vmem:[#allocation8 + $0xf8] sm:$0xff]
        %v833 = vld [vmem:[%s7] sm:$0x3]
        %v834 = vld [vmem:[%s8] sm:$0x3]
        %v835 = vld [vmem:[#allocation9] sm:$0xff]
        %v836 = vld [vmem:[#allocation9 + $0x8] sm:$0xff]
        %v837 = vld [vmem:[#allocation9 + $0x10] sm:$0xff]
        %v838 = vld [vmem:[#allocation9 + $0x18] sm:$0xff]
        %v839 = vld [vmem:[#allocation9 + $0x20] sm:$0xff]
        %v840 = vld [vmem:[#allocation9 + $0x28] sm:$0xff]
        %v841 = vld [vmem:[#allocation9 + $0x30] sm:$0xff]
        %v842 = vld [vmem:[#allocation9 + $0x38] sm:$0xff]
        %v843 = vld [vmem:[#allocation9 + $0x40] sm:$0xff]
        %v844 = vld [vmem:[#allocation9 + $0x48] sm:$0xff]
        %v845 = vld [vmem:[#allocation9 + $0x50] sm:$0xff]
        %v846 = vld [vmem:[#allocation9 + $0x58] sm:$0xff]
        %v847 = vld [vmem:[#allocation9 + $0x60] sm:$0xff]
        %v848 = vld [vmem:[#allocation9 + $0x68] sm:$0xff]
        %v849 = vld [vmem:[#allocation9 + $0x70] sm:$0xff]
        %v850 = vld [vmem:[#allocation9 + $0x78] sm:$0xff]
        %v851 = vld [vmem:[#allocation9 + $0x80] sm:$0xff]
        %v852 = vld [vmem:[#allocation9 + $0x88] sm:$0xff]
        %v853 = vld [vmem:[#allocation9 + $0x90] sm:$0xff]
        %v854 = vld [vmem:[#allocation9 + $0x98] sm:$0xff]
        %v855 = vld [vmem:[#allocation9 + $0xa0] sm:$0xff]
        %v856 = vld [vmem:[#allocation9 + $0xa8] sm:$0xff]
        %v857 = vld [vmem:[#allocation9 + $0xb0] sm:$0xff]
        %v858 = vld [vmem:[#allocation9 + $0xb8] sm:$0xff]
        %v859 = vld [vmem:[#allocation9 + $0xc0] sm:$0xff]
        %v860 = vld [vmem:[#allocation9 + $0xc8] sm:$0xff]
        %v861 = vld [vmem:[#allocation9 + $0xd0] sm:$0xff]
        %v862 = vld [vmem:[#allocation9 + $0xd8] sm:$0xff]
        %v863 = vld [vmem:[#allocation9 + $0xe0] sm:$0xff]
        %v864 = vld [vmem:[#allocation9 + $0xe8] sm:$0xff]
        %v865 = vld [vmem:[#allocation9 + $0xf0] sm:$0xff]
        %v866 = vld [vmem:[#allocation9 + $0xf8] sm:$0xff]
        %867 = vmatprep.subr.mxu0 %v802
        %868 = vmatpush1.msra.mxu0 %v801
        %869 = vmatprep.subr.mxu0 %v804
        %870 = vmatpush1.msra.mxu0 %v803
        %871 = vmatprep.subr.mxu0 %v806
        %872 = vmatpush1.msra.mxu0 %v805
        %873 = vmatprep.subr.mxu0 %v808
        %874 = vmatpush1.msra.mxu0 %v807
        %875 = vmatprep.subr.mxu0 %v810
        %876 = vmatpush1.msra.mxu0 %v809
        %877 = vmatprep.subr.mxu0 %v812
        %878 = vmatpush1.msra.mxu0 %v811
        %879 = vmatprep.subr.mxu0 %v814
        %880 = vmatpush1.msra.mxu0 %v813
        %881 = vmatprep.subr.mxu0 %v816
        %882 = vmatpush1.msra.mxu0 %v815
        %883 = vmatprep.subr.mxu0 %v818
        %884 = vmatpush1.msra.mxu0 %v817
        %885 = vmatprep.subr.mxu0 %v820
        %886 = vmatpush1.msra.mxu0 %v819
        %887 = vmatprep.subr.mxu0 %v822
        %888 = vmatpush1.msra.mxu0 %v821
        %889 = vmatprep.subr.mxu0 %v824
        %890 = vmatpush1.msra.mxu0 %v823
        %891 = vmatprep.subr.mxu0 %v826
        %892 = vmatpush1.msra.mxu0 %v825
        %893 = vmatprep.subr.mxu0 %v828
        %894 = vmatpush1.msra.mxu0 %v827
        %895 = vmatprep.subr.mxu0 %v830
        %896 = vmatpush1.msra.mxu0 %v829
        %897 = vmatprep.subr.mxu0 %v832
        %898 = vmatpush1.msra.mxu0 %v831
        %899 = vmatprep.subr.mxu0 0.0
        %900 = vmatpush1.msra.mxu0 0.0
        %901 = vmatprep.subr.mxu0 0.0
        %902 = vmatpush1.msra.mxu0 0.0
        %903 = vmatprep.subr.mxu0 0.0
        %904 = vmatpush1.msra.mxu0 0.0
        %905 = vmatprep.subr.mxu0 0.0
        %906 = vmatpush1.msra.mxu0 0.0
        %907 = vmatprep.subr.mxu0 0.0
        %908 = vmatpush1.msra.mxu0 0.0
        %909 = vmatprep.subr.mxu0 0.0
        %910 = vmatpush1.msra.mxu0 0.0
        %911 = vmatprep.subr.mxu0 0.0
        %912 = vmatpush1.msra.mxu0 0.0
        %913 = vmatprep.subr.mxu0 0.0
        %914 = vmatpush1.msra.mxu0 0.0
        %915 = vmatprep.subr.mxu0 0.0
        %916 = vmatpush1.msra.mxu0 0.0
        %917 = vmatprep.subr.mxu0 0.0
        %918 = vmatpush1.msra.mxu0 0.0
        %919 = vmatprep.subr.mxu0 0.0
        %920 = vmatpush1.msra.mxu0 0.0
        %921 = vmatprep.subr.mxu0 0.0
        %922 = vmatpush1.msra.mxu0 0.0
        %923 = vmatprep.subr.mxu0 0.0
        %924 = vmatpush1.msra.mxu0 0.0
        %925 = vmatprep.subr.mxu0 0.0
        %926 = vmatpush1.msra.mxu0 0.0
        %927 = vmatprep.subr.mxu0 0.0
        %928 = vmatpush1.msra.mxu0 0.0
        %929 = vmatprep.subr.mxu0 0.0
        %930 = vmatpush1.msra.mxu0 0.0
        %931 = vmatprep.mubr.f32.mxu0 0.0
        %932 = vmatmul.mubr.f32.gmra.mrb[0].mxu0 %v800
        %v933 = vpop.f32.mrb[0].mxu0
        %v934 = vadd.f32 0.0, %v933
        %v935 = vpop.f32.mrb[0].mxu0
        %v936 = vadd.f32 0.0, %v935
        %937 = vdwg.mxu0
        %v938 = vrot.slane %v934, 4
        %v939 = vadd.f32 %v934, %v938
        %v940 = vrot.slane %v939, 2
        %v941 = vadd.f32 %v939, %v940
        %v942 = vrot.slane %v941, 1
        %v943 = vadd.f32 %v941, %v942
        %v944 = vrot.slane %v936, 4
        %v945 = vadd.f32 %v936, %v944
        %v946 = vrot.slane %v945, 2
        %v947 = vadd.f32 %v945, %v946
        %v948 = vrot.slane %v947, 1
        %v949 = vadd.f32 %v947, %v948
        %v950 = vmul.f32 %v943, %v657
        %v951 = vmul.f32 %v949, %v657
        %v952 = vsub.f32 %v934, %v950
        %v953 = vsub.f32 %v936, %v951
        %v954 = vmul.f32 %v952, %v952
        %v955 = vmul.f32 %v953, %v953
        %v956 = vrot.slane %v954, 4
        %v957 = vadd.f32 %v954, %v956
        %v958 = vrot.slane %v957, 2
        %v959 = vadd.f32 %v957, %v958
        %v960 = vrot.slane %v959, 1
        %v961 = vadd.f32 %v959, %v960
        %v962 = vrot.slane %v955, 4
        %v963 = vadd.f32 %v955, %v962
        %v964 = vrot.slane %v963, 2
        %v965 = vadd.f32 %v963, %v964
        %v966 = vrot.slane %v965, 1
        %v967 = vadd.f32 %v965, %v966
        %v968 = vmul.f32 %v961, %v657
        %v969 = vmul.f32 %v967, %v657
        %v970 = vadd.f32 %v968, 1e-05
        %v971 = vadd.f32 %v969, 1e-05
        %v972 = vrsqrt.pop %v970
        %v973 = vrsqrt.pop %v971
        %v974 = vmul.f32 %v952, %v972
        %v975 = vmul.f32 %v953, %v973
        %v977 = vlaneseq
        %v978 = vshrl.u32 %v977, 7
        %v979 = vsub.s32 0, %v978
        %v980 = vrot.slane %v833, %v979
        %v981 = vlaneseq
        %v982 = vshrl.u32 %v981, 7
        %v983 = vsub.s32 1, %v982
        %v984 = vrot.slane %v833, %v983
        %v987 = vmul.f32 %v974, %v980
        %v988 = vmul.f32 %v975, %v984
        %v990 = vlaneseq
        %v991 = vshrl.u32 %v990, 7
        %v992 = vsub.s32 0, %v991
        %v993 = vrot.slane %v834, %v992
        %v994 = vlaneseq
        %v995 = vshrl.u32 %v994, 7
        %v996 = vsub.s32 1, %v995
        %v997 = vrot.slane %v834, %v996
        %v1000 = vadd.f32 %v987, %v993
        %v1001 = vadd.f32 %v988, %v997
        %v1002 = vmax.f32 %v1000, 0.0
        %v1003 = vmax.f32 %v1001, 0.0
        %1004 = vmatprep.subr.mxu0 0.0
        %1005 = vmatpush1.msra.mxu0 %v835
        %1006 = vmatprep.subr.mxu0 0.0
        %1007 = vmatpush1.msra.mxu0 %v836
        %1008 = vmatprep.subr.mxu0 0.0
        %1009 = vmatpush1.msra.mxu0 %v837
        %1010 = vmatprep.subr.mxu0 0.0
        %1011 = vmatpush1.msra.mxu0 %v838
        %1012 = vmatprep.subr.mxu0 0.0
        %1013 = vmatpush1.msra.mxu0 %v839
        %1014 = vmatprep.subr.mxu0 0.0
        %1015 = vmatpush1.msra.mxu0 %v840
        %1016 = vmatprep.subr.mxu0 0.0
        %1017 = vmatpush1.msra.mxu0 %v841
        %1018 = vmatprep.subr.mxu0 0.0
        %1019 = vmatpush1.msra.mxu0 %v842
        %1020 = vmatprep.subr.mxu0 0.0
        %1021 = vmatpush1.msra.mxu0 %v843
        %1022 = vmatprep.subr.mxu0 0.0
        %1023 = vmatpush1.msra.mxu0 %v844
        %1024 = vmatprep.subr.mxu0 0.0
        %1025 = vmatpush1.msra.mxu0 %v845
        %1026 = vmatprep.subr.mxu0 0.0
        %1027 = vmatpush1.msra.mxu0 %v846
        %1028 = vmatprep.subr.mxu0 0.0
        %1029 = vmatpush1.msra.mxu0 %v847
        %1030 = vmatprep.subr.mxu0 0.0
        %1031 = vmatpush1.msra.mxu0 %v848
        %1032 = vmatprep.subr.mxu0 0.0
        %1033 = vmatpush1.msra.mxu0 %v849
        %1034 = vmatprep.subr.mxu0 0.0
        %1035 = vmatpush1.msra.mxu0 %v850
        %1036 = vmatprep.subr.mxu0 0.0
        %1037 = vmatpush1.msra.mxu0 %v851
        %1038 = vmatprep.subr.mxu0 0.0
        %1039 = vmatpush1.msra.mxu0 %v852
        %1040 = vmatprep.subr.mxu0 0.0
        %1041 = vmatpush1.msra.mxu0 %v853
        %1042 = vmatprep.subr.mxu0 0.0
        %1043 = vmatpush1.msra.mxu0 %v854
        %1044 = vmatprep.subr.mxu0 0.0
        %1045 = vmatpush1.msra.mxu0 %v855
        %1046 = vmatprep.subr.mxu0 0.0
        %1047 = vmatpush1.msra.mxu0 %v856
        %1048 = vmatprep.subr.mxu0 0.0
        %1049 = vmatpush1.msra.mxu0 %v857
        %1050 = vmatprep.subr.mxu0 0.0
        %1051 = vmatpush1.msra.mxu0 %v858
        %1052 = vmatprep.subr.mxu0 0.0
        %1053 = vmatpush1.msra.mxu0 %v859
        %1054 = vmatprep.subr.mxu0 0.0
        %1055 = vmatpush1.msra.mxu0 %v860
        %1056 = vmatprep.subr.mxu0 0.0
        %1057 = vmatpush1.msra.mxu0 %v861
        %1058 = vmatprep.subr.mxu0 0.0
        %1059 = vmatpush1.msra.mxu0 %v862
        %1060 = vmatprep.subr.mxu0 0.0
        %1061 = vmatpush1.msra.mxu0 %v863
        %1062 = vmatprep.subr.mxu0 0.0
        %1063 = vmatpush1.msra.mxu0 %v864
        %1064 = vmatprep.subr.mxu0 0.0
        %1065 = vmatpush1.msra.mxu0 %v865
        %1066 = vmatprep.subr.mxu0 0.0
        %1067 = vmatpush1.msra.mxu0 %v866
        %1068 = vmatprep.mubr.f32.mxu0 %v1003
        %1069 = vmatmul.mubr.f32.gmra.mrb[0].mxu0 %v1002
        %v1070 = vpop.f32.mrb[0].mxu0
        %v1071 = vadd.f32 0.0, %v1070
        %v1072 = vpop.f32.mrb[0].mxu0
        %1073 = vdwg.mxu0
        %p1074 = scmp.eq.s32.totalorder %s24, 0
        // Predicated region
        $region77: #{moco_forward.1} parent=59 // pred_check
          %p1075 = pneg %p1074
        $region78: #{moco_forward.1} parent=59 // pred_check_branch
          %1077 = sbr.rel (%p1075) target = $region80
        $region79: #{moco_forward.1} parent=59 // pred_region
          %1078 = vst [vmem:[%s10] sm:$0x1] 0.0
          %1079 = vst [vmem:[#allocation2] sm:$0xff] %v1071
          %1080 = vst [vmem:[#allocation3] sm:$0xff] %v800
        $region80: #{moco_forward.1} parent=59 // pred_fallthru
          _
        %p1081 = scmp.eq.s32.totalorder %s24, 1
        // Predicated region
        $region81: #{moco_forward.1} parent=59 // pred_check
          %p1082 = pneg %p1081
        $region82: #{moco_forward.1} parent=59 // pred_check_branch
          %1084 = sbr.rel (%p1082) target = $region84
        $region83: #{moco_forward.1} parent=59 // pred_region
          %v1085 = vld [vmem:[#allocation2] sm:$0xff]
          %v1086 = vld [vmem:[#allocation3] sm:$0xff]
          %v1087 = vmul.f32 %v1085, %v1085
          %1088 = vadd.xlane.f32.xlu0 %v1087
          %v1089 = vpop.xlane.xlu0 %1088
          %v1090 = vmax.f32 %v1089, 1e-24
          %v1091 = vrsqrt.pop %v1090
          %v1092 = vmul.f32 %v1085, %v1091
          %v1093 = vmul.f32 %v800, %v800
          %1094 = vadd.xlane.f32.xlu0 %v1093
          %v1095 = vpop.xlane.xlu0 %1094
          %v1096 = vmax.f32 %v1095, 1e-24
          %v1097 = vrsqrt.pop %v1096
          %v1098 = vmul.f32 %v800, %v1097
          %1099 = vmatprep.subr.mxu0 0.0
          %1100 = vmatpush1.xpose.msra.mxu0 %v1098
          %1101 = vmatprep.subr.mxu0 0.0
          %1102 = vmatpush1.xpose.msra.mxu0 0.0
          %1103 = vmatprep.subr.mxu0 0.0
          %1104 = vmatpush1.xpose.msra.mxu0 0.0
          %1105 = vmatprep.subr.mxu0 0.0
          %1106 = vmatpush1.xpose.msra.mxu0 0.0
          %1107 = vmatprep.subr.mxu0 0.0
          %1108 = vmatpush1.xpose.msra.mxu0 0.0
          %1109 = vmatprep.subr.mxu0 0.0
          %1110 = vmatpush1.xpose.msra.mxu0 0.0
          %1111 = vmatprep.subr.mxu0 0.0
          %1112 = vmatpush1.xpose.msra.mxu0 0.0
          %1113 = vmatprep.subr.mxu0 0.0
          %1114 = vmatpush1.xpose.msra.mxu0 0.0
          %1115 = vmatprep.subr.mxu0 0.0
          %1116 = vmatpush1.xpose.msra.mxu0 0.0
          %1117 = vmatprep.subr.mxu0 0.0
          %1118 = vmatpush1.xpose.msra.mxu0 0.0
          %1119 = vmatprep.subr.mxu0 0.0
          %1120 = vmatpush1.xpose.msra.mxu0 0.0
          %1121 = vmatprep.subr.mxu0 0.0
          %1122 = vmatpush1.xpose.msra.mxu0 0.0
          %1123 = vmatprep.subr.mxu0 0.0
          %1124 = vmatpush1.xpose.msra.mxu0 0.0
          %1125 = vmatprep.subr.mxu0 0.0
          %1126 = vmatpush1.xpose.msra.mxu0 0.0
          %1127 = vmatprep.subr.mxu0 0.0
          %1128 = vmatpush1.xpose.msra.mxu0 0.0
          %1129 = vmatprep.subr.mxu0 0.0
          %1130 = vmatpush1.xpose.msra.mxu0 0.0
          %1131 = vmatprep.subr.mxu0 0.0
          %1132 = vmatpush1.xpose.msra.mxu0 0.0
          %1133 = vmatprep.subr.mxu0 0.0
          %1134 = vmatpush1.xpose.msra.mxu0 0.0
          %1135 = vmatprep.subr.mxu0 0.0
          %1136 = vmatpush1.xpose.msra.mxu0 0.0
          %1137 = vmatprep.subr.mxu0 0.0
          %1138 = vmatpush1.xpose.msra.mxu0 0.0
          %1139 = vmatprep.subr.mxu0 0.0
          %1140 = vmatpush1.xpose.msra.mxu0 0.0
          %1141 = vmatprep.subr.mxu0 0.0
          %1142 = vmatpush1.xpose.msra.mxu0 0.0
          %1143 = vmatprep.subr.mxu0 0.0
          %1144 = vmatpush1.xpose.msra.mxu0 0.0
          %1145 = vmatprep.subr.mxu0 0.0
          %1146 = vmatpush1.xpose.msra.mxu0 0.0
          %1147 = vmatprep.subr.mxu0 0.0
          %1148 = vmatpush1.xpose.msra.mxu0 0.0
          %1149 = vmatprep.subr.mxu0 0.0
          %1150 = vmatpush1.xpose.msra.mxu0 0.0
          %1151 = vmatprep.subr.mxu0 0.0
          %1152 = vmatpush1.xpose.msra.mxu0 0.0
          %1153 = vmatprep.subr.mxu0 0.0
          %1154 = vmatpush1.xpose.msra.mxu0 0.0
          %1155 = vmatprep.subr.mxu0 0.0
          %1156 = vmatpush1.xpose.msra.mxu0 0.0
          %1157 = vmatprep.subr.mxu0 0.0
          %1158 = vmatpush1.xpose.msra.mxu0 0.0
          %1159 = vmatprep.subr.mxu0 0.0
          %1160 = vmatpush1.xpose.msra.mxu0 0.0
          %1161 = vmatprep.subr.mxu0 0.0
          %1162 = vmatpush1.xpose.msra.mxu0 0.0
          %1163 = vmatprep.mubr.f32.mxu0 0.0
          %1164 = vmatmul.mubr.f32.gmra.mrb[0].mxu0 %v1092
          %v1165 = vpop.f32.mrb[0].mxu0
          %v1166 = vadd.f32 0.0, %v1165
          %v1167 = vpop.f32.mrb[0].mxu0
          %1168 = vdwg.mxu0
          %v1169 = vlaneseq
          %v1170 = vshrl.u32 %v1169, 7
          %v1171 = vlaneseq
          %v1172 = vand.u32 %v1171, 127
          %vm1173 = vcmp.eq.s32.totalorder %v1170, %v1172
          %vm1174 = vcmask 64512
          %v1175 = vsel %vm1174, %v1166, -inf
          %1176 = vmax.xlane.f32.xlu0 %v1175
          %v1177 = vpop.xlane.xlu0 %1176
          %v1178 = vsub.f32 %v1166, %v1177
          %v1179 = vmul.f32 %v1178, 1.442695
          %v1180 = vpow.pop %v1179
          %v1181 = vsel %vm1174, %v1180, 0.0
          %1182 = vadd.xlane.f32.xlu0 %v1181
          %v1183 = vpop.xlane.xlu0 %1182
          %v1184 = vlog2.pop %v1183
          %v1185 = vmul.f32 %v1184, 0.6931472
          %v1186 = vadd.f32 %v1185, %v1177
          %v1187 = vsel %vm1173, %v1166, 0.0
          %v1188 = vsel %vm1174, %v1187, 0.0
          %1189 = vadd.xlane.f32.xlu0 %v1188
          %v1190 = vpop.xlane.xlu0 %1189
          %v1191 = vsub.f32 %v1186, %v1190
          %vm1192 = vcmask 7168
          %v1193 = vsel %vm1192, %v1191, 0.0
          %1194 = vadd.xlane.f32.xlu0 %v1193
          %v1195 = vpop.xlane.xlu0 %1194
          %v1196 = vrot.slane %v1195, 4
          %v1197 = vadd.f32 %v1195, %v1196
          %v1198 = vrot.slane %v1197, 2
          %v1199 = vadd.f32 %v1197, %v1198
          %v1200 = vrot.slane %v1199, 1
          %v1201 = vadd.f32 %v1199, %v1200
          %s1202 = vtos %v1201
          %v1203 = vstv %s1202
          %v1204 = vmul.f32 %v1203, %v657
          %v1205 = vmul.f32 %v1204, 2.0
          %v1206 = vmul.f32 %v1071, %v1071
          %1207 = vadd.xlane.f32.xlu0 %v1206
          %v1208 = vpop.xlane.xlu0 %1207
          %v1209 = vmax.f32 %v1208, 1e-24
          %v1210 = vrsqrt.pop %v1209
          %v1211 = vmul.f32 %v1071, %v1210
          %v1212 = vmul.f32 %v1086, %v1086
          %1213 = vadd.xlane.f32.xlu0 %v1212
          %v1214 = vpop.xlane.xlu0 %1213
          %v1215 = vmax.f32 %v1214, 1e-24
          %v1216 = vrsqrt.pop %v1215
          %v1217 = vmul.f32 %v1086, %v1216
          %1218 = vmatprep.subr.mxu0 0.0
          %1219 = vmatpush1.xpose.msra.mxu0 %v1217
          %1220 = vmatprep.subr.mxu0 0.0
          %1221 = vmatpush1.xpose.msra.mxu0 0.0
          %1222 = vmatprep.subr.mxu0 0.0
          %1223 = vmatpush1.xpose.msra.mxu0 0.0
          %1224 = vmatprep.subr.mxu0 0.0
          %1225 = vmatpush1.xpose.msra.mxu0 0.0
          %1226 = vmatprep.subr.mxu0 0.0
          %1227 = vmatpush1.xpose.msra.mxu0 0.0
          %1228 = vmatprep.subr.mxu0 0.0
          %1229 = vmatpush1.xpose.msra.mxu0 0.0
          %1230 = vmatprep.subr.mxu0 0.0
          %1231 = vmatpush1.xpose.msra.mxu0 0.0
          %1232 = vmatprep.subr.mxu0 0.0
          %1233 = vmatpush1.xpose.msra.mxu0 0.0
          %1234 = vmatprep.subr.mxu0 0.0
          %1235 = vmatpush1.xpose.msra.mxu0 0.0
          %1236 = vmatprep.subr.mxu0 0.0
          %1237 = vmatpush1.xpose.msra.mxu0 0.0
          %1238 = vmatprep.subr.mxu0 0.0
          %1239 = vmatpush1.xpose.msra.mxu0 0.0
          %1240 = vmatprep.subr.mxu0 0.0
          %1241 = vmatpush1.xpose.msra.mxu0 0.0
          %1242 = vmatprep.subr.mxu0 0.0
          %1243 = vmatpush1.xpose.msra.mxu0 0.0
          %1244 = vmatprep.subr.mxu0 0.0
          %1245 = vmatpush1.xpose.msra.mxu0 0.0
          %1246 = vmatprep.subr.mxu0 0.0
          %1247 = vmatpush1.xpose.msra.mxu0 0.0
          %1248 = vmatprep.subr.mxu0 0.0
          %1249 = vmatpush1.xpose.msra.mxu0 0.0
          %1250 = vmatprep.subr.mxu0 0.0
          %1251 = vmatpush1.xpose.msra.mxu0 0.0
          %1252 = vmatprep.subr.mxu0 0.0
          %1253 = vmatpush1.xpose.msra.mxu0 0.0
          %1254 = vmatprep.subr.mxu0 0.0
          %1255 = vmatpush1.xpose.msra.mxu0 0.0
          %1256 = vmatprep.subr.mxu0 0.0
          %1257 = vmatpush1.xpose.msra.mxu0 0.0
          %1258 = vmatprep.subr.mxu0 0.0
          %1259 = vmatpush1.xpose.msra.mxu0 0.0
          %1260 = vmatprep.subr.mxu0 0.0
          %1261 = vmatpush1.xpose.msra.mxu0 0.0
          %1262 = vmatprep.subr.mxu0 0.0
          %1263 = vmatpush1.xpose.msra.mxu0 0.0
          %1264 = vmatprep.subr.mxu0 0.0
          %1265 = vmatpush1.xpose.msra.mxu0 0.0
          %1266 = vmatprep.subr.mxu0 0.0
          %1267 = vmatpush1.xpose.msra.mxu0 0.0
          %1268 = vmatprep.subr.mxu0 0.0
          %1269 = vmatpush1.xpose.msra.mxu0 0.0
          %1270 = vmatprep.subr.mxu0 0.0
          %1271 = vmatpush1.xpose.msra.mxu0 0.0
          %1272 = vmatprep.subr.mxu0 0.0
          %1273 = vmatpush1.xpose.msra.mxu0 0.0
          %1274 = vmatprep.subr.mxu0 0.0
          %1275 = vmatpush1.xpose.msra.mxu0 0.0
          %1276 = vmatprep.subr.mxu0 0.0
          %1277 = vmatpush1.xpose.msra.mxu0 0.0
          %1278 = vmatprep.subr.mxu0 0.0
          %1279 = vmatpush1.xpose.msra.mxu0 0.0
          %1280 = vmatprep.subr.mxu0 0.0
          %1281 = vmatpush1.xpose.msra.mxu0 0.0
          %1282 = vmatprep.mubr.f32.mxu0 0.0
          %1283 = vmatmul.mubr.f32.gmra.mrb[0].mxu0 %v1211
          %v1284 = vpop.f32.mrb[0].mxu0
          %v1285 = vadd.f32 0.0, %v1284
          %v1286 = vpop.f32.mrb[0].mxu0
          %1287 = vdwg.mxu0
          %v1288 = vsel %vm1174, %v1285, -inf
          %1289 = vmax.xlane.f32.xlu0 %v1288
          %v1290 = vpop.xlane.xlu0 %1289
          %v1291 = vsub.f32 %v1285, %v1290
          %v1292 = vmul.f32 %v1291, 1.442695
          %v1293 = vpow.pop %v1292
          %v1294 = vsel %vm1174, %v1293, 0.0
          %1295 = vadd.xlane.f32.xlu0 %v1294
          %v1296 = vpop.xlane.xlu0 %1295
          %v1297 = vlog2.pop %v1296
          %v1298 = vmul.f32 %v1297, 0.6931472
          %v1299 = vadd.f32 %v1298, %v1290
          %v1300 = vsel %vm1173, %v1285, 0.0
          %v1301 = vsel %vm1174, %v1300, 0.0
          %1302 = vadd.xlane.f32.xlu0 %v1301
          %v1303 = vpop.xlane.xlu0 %1302
          %v1304 = vsub.f32 %v1299, %v1303
          %v1305 = vsel %vm1192, %v1304, 0.0
          %1306 = vadd.xlane.f32.xlu0 %v1305
          %v1307 = vpop.xlane.xlu0 %1306
          %v1308 = vrot.slane %v1307, 4
          %v1309 = vadd.f32 %v1307, %v1308
          %v1310 = vrot.slane %v1309, 2
          %v1311 = vadd.f32 %v1309, %v1310
          %v1312 = vrot.slane %v1311, 1
          %v1313 = vadd.f32 %v1311, %v1312
          %s1314 = vtos %v1313
          %v1315 = vstv %s1314
          %v1316 = vmul.f32 %v1315, %v657
          %v1317 = vmul.f32 %v1316, 2.0
          %v1318 = vadd.f32 %v1205, %v1317
          %v1319 = vmul.f32 %v1318, 0.5
          %v1320 = vmul.f32 %v1085, %v1086
          %1321 = vadd.xlane.f32.xlu0 %v1320
          %v1322 = vpop.xlane.xlu0 %1321
          %v1323 = vrsqrt.pop %v1089
          %v1324 = vmul.f32 %v1089, %v1323
          %vm1325 = vcmp.eq.f32.partialorder %v1089, inf
          %v1326 = vsel %vm1325, %v1089, %v1324
          %vm1327 = vcmp.eq.f32.partialorder %v1089, 0.0
          %v1328 = vand.u32 %v1089, 2147483648
          %v1329 = vsel %vm1327, %v1328, %v1326
          %v1330 = vmax.f32 %v1329, 1e-08
          %v1331 = vrsqrt.pop %v1214
          %v1332 = vmul.f32 %v1214, %v1331
          %vm1333 = vcmp.eq.f32.partialorder %v1214, inf
          %v1334 = vsel %vm1333, %v1214, %v1332
          %vm1335 = vcmp.eq.f32.partialorder %v1214, 0.0
          %v1336 = vand.u32 %v1214, 2147483648
          %v1337 = vsel %vm1335, %v1336, %v1334
          %v1338 = vmax.f32 %v1337, 1e-08
          %v1339 = vmul.f32 %v1330, %v1338
          %v1340 = vrcp.pop %v1339
          %v1341 = vmul.f32 %v1322, %v1340
          %v1342 = vsel %vm1192, %v1341, 0.0
          %1343 = vadd.xlane.f32.xlu0 %v1342
          %v1344 = vpop.xlane.xlu0 %1343
          %v1345 = vrot.slane %v1344, 4
          %v1346 = vadd.f32 %v1344, %v1345
          %v1347 = vrot.slane %v1346, 2
          %v1348 = vadd.f32 %v1346, %v1347
          %v1349 = vrot.slane %v1348, 1
          %v1350 = vadd.f32 %v1348, %v1349
          %s1351 = vtos %v1350
          %v1352 = vstv %s1351
          %v1353 = vmul.f32 %v1352, %v657
          %v1354 = vmul.f32 %v1085, %v800
          %1355 = vadd.xlane.f32.xlu0 %v1354
          %v1356 = vpop.xlane.xlu0 %1355
          %v1357 = vrsqrt.pop %v1095
          %v1358 = vmul.f32 %v1095, %v1357
          %vm1359 = vcmp.eq.f32.partialorder %v1095, inf
          %v1360 = vsel %vm1359, %v1095, %v1358
          %vm1361 = vcmp.eq.f32.partialorder %v1095, 0.0
          %v1362 = vand.u32 %v1095, 2147483648
          %v1363 = vsel %vm1361, %v1362, %v1360
          %v1364 = vmax.f32 %v1363, 1e-08
          %v1365 = vmul.f32 %v1330, %v1364
          %v1366 = vrcp.pop %v1365
          %v1367 = vmul.f32 %v1356, %v1366
          %v1368 = vsel %vm1192, %v1367, 0.0
          %1369 = vadd.xlane.f32.xlu0 %v1368
          %v1370 = vpop.xlane.xlu0 %1369
          %v1371 = vrot.slane %v1370, 4
          %v1372 = vadd.f32 %v1370, %v1371
          %v1373 = vrot.slane %v1372, 2
          %v1374 = vadd.f32 %v1372, %v1373
          %v1375 = vrot.slane %v1374, 1
          %v1376 = vadd.f32 %v1374, %v1375
          %s1377 = vtos %v1376
          %v1378 = vstv %s1377
          %v1379 = vmul.f32 %v1378, %v657
          %vm1380 = vcmp.eq.s32.totalorder %v1172, 0
          %v1381 = vsel %vm1380, %v1319, 0.0
          %vm1382 = vcmp.eq.s32.totalorder %v1172, 1
          %v1383 = vsel %vm1382, %v1353, 0.0
          %v1384 = vadd.f32 %v1381, %v1383
          %vm1385 = vcmp.eq.s32.totalorder %v1172, 2
          %v1386 = vsel %vm1385, %v1379, 0.0
          %v1387 = vadd.f32 %v1384, %v1386
          %1388 = vst [vmem:[%s10] sm:$0x1] %v1387
        $region84: #{moco_forward.1} parent=59 // pred_fallthru
          _
        // Predicated region
        $region85: #{moco_forward.1} parent=59 // pred_check
          %p1389 = pneg %p252
        $region86: #{moco_forward.1} parent=59 // pred_check_branch
          %1391 = sbr.rel (%p1389) target = $region88
        $region87: #{moco_forward.1} parent=59 // pred_region
          _
        $region88: #{moco_forward.1} parent=59 // pred_fallthru
          _
        // Predicated region
        $region89: #{moco_forward.1} parent=59 // pred_check
          %p1392 = pneg %p252
        $region90: #{moco_forward.1} parent=59 // pred_check_branch
          %1394 = sbr.rel (%p1392) target = $region92
        $region91: #{moco_forward.1} parent=59 // pred_region
          _
        $region92: #{moco_forward.1} parent=59 // pred_fallthru
          _
      $region60: #{moco_forward.1} parent=5 // pred_fallthru
        _
      %p1395 = scmp.le.s32.totalorder 2, %s19
      // Predicated region
      $region93: #{moco_forward.1} parent=5 // pred_check
        %p1396 = pneg %p1395
      $region94: #{moco_forward.1} parent=5 // pred_check_branch
        %1398 = sbr.rel (%p1396) target = $region96
      $region95: #{moco_forward.1} parent=5 // pred_region
        %s1399 = ssub.s32 %s19, 2
      $region96: #{moco_forward.1} parent=5 // pred_fallthru
        _
    $region6: #{moco_forward.1} parent=1 // loop_footer
      %s23 = sadd.s32 1, %s19
    $region7: #{moco_forward.1} parent=1 // loop_footer_branch
      %18 = sbr.rel target = $region3
    $region8: #{moco_forward.1} parent=1 // loop_exit
      _
    %1400 = vsyncpa [#allocation5], 1
    %s1401 = scalar_lea.sflag [#allocation5], 1
    %1402 = vsyncpa %s1401, 1
    %1403 = vsyncpa [#allocation7], 1
    %1404 = vsyncpa [#allocation10], 1

</llo_original>
